<compile_context>
chip_gen: v7x
topology: tpu7x:2x2x1
jax: 0.10.0
libtpu: 0.0.40
codegen_flags: <defaults>
</compile_context>

<pallas_src>
import numpy as np
import jax
import jax.numpy as jnp
from jax.experimental import pallas as pl
from jax.experimental.pallas import tpu as pltpu


def _round_up(x, m):
    return ((x + m - 1) // m) * m


# -----------------------------------------------------------------------------
# Pallas kernel: attention + fused output head for a block of BB batch rows.
# -----------------------------------------------------------------------------
def wao_head_kernel(l_n_ref,                      # (BB, 1) int32
                    x_ref, hs_ref,                # bf16 activations
                    watt_ref, batt_ref,           # bf16 W_att^T, f32 bias
                    w1_ref, b1_ref,               # fused layer-1 (2*hSp, hSp) / bias
                    w2_ref, b2_ref,               # layer-2 weights / bias
                    out_ref):
    BB, mLn, hSp = x_ref.shape
    mLw = hs_ref.shape[1]
    nops_p = out_ref.shape[2]
    f32, bf16 = jnp.float32, jnp.bfloat16

    x = x_ref[...]            # (BB, mLn, hSp) bf16
    hs = hs_ref[...]          # (BB, mLw, hSp) bf16

    # W_att projection — flatten batch*token rows so the MXU sees BB*mLn rows.
    wa = jnp.dot(x.reshape(BB * mLn, hSp), watt_ref[...],
                 preferred_element_type=f32) + batt_ref[...]
    wa = wa.reshape(BB, mLn, hSp)

    # attention logits: att[b, w, n] = <hs[b, w, :], W_att(wenc_n)[b, n, :]>
    att = jnp.einsum('bwh,bnh->bwn', hs, wa.astype(bf16),
                     preferred_element_type=f32)          # (BB, mLw, mLn) f32

    # length mask, vectorized (PyTorch: att[b, :, l_n[b]:] = -1e10).
    ln = l_n_ref[...][:, :, None]                          # (BB, 1, 1) int32
    col = jax.lax.broadcasted_iota(jnp.int32, (BB, mLw, mLn), 2)
    att = jnp.where(col < ln, att, -1e10)

    # softmax over the NL-token axis in f32.  Max-subtraction keeps this finite
    # even for a fully-masked row (all logits == -1e10 -> uniform p, no NaN).
    m = jnp.max(att, axis=-1, keepdims=True)
    e = jnp.exp(att - m)
    inv = pl.reciprocal(jnp.sum(e, axis=-1, keepdims=True), approx=True)
    p = e * inv                                           # (BB, mLw, mLn)

    # context vectors: c_n[b, w, :] = sum_n p[b, w, n] * wenc_n[b, n, :]
    c_n = jnp.einsum('bwn,bnh->bwh', p.astype(bf16), x,
                     preferred_element_type=f32)          # (BB, mLw, hSp) f32

    # fused ao_out layer 1 as ONE matmul with K = 2*hSp:
    #   h1 = tanh([c_n | hs] @ [[W_c^T W1c^T]; [W_hs^T W1h^T]] + b1_fused)
    cat = jnp.concatenate([c_n.reshape(BB * mLw, hSp).astype(bf16),
                           hs.reshape(BB * mLw, hSp)], axis=-1)  # (BB*mLw, 2*hSp)
    h1 = jnp.tanh(jnp.dot(cat, w1_ref[...], preferred_element_type=f32)
                  + b1_ref[...])                          # (BB*mLw, hSp) f32

    s = jnp.dot(h1.astype(bf16), w2_ref[...],
                preferred_element_type=f32) + b2_ref[...]  # (BB*mLw, nops_p)
    out_ref[...] = s.reshape(BB, mLw, nops_p).astype(out_ref.dtype)


def _auto_block_b(bS, mLn_p, mLw_p, hSp, nops_p, vmem_budget_bytes):
    """Largest batch block whose per-step VMEM footprint fits the budget,
    capped so a small batch is not padded beyond round_up(bS, 8)."""
    per_row = (
        2 * 2 * mLn_p * hSp          # wenc_n  bf16, double-buffered
        + 2 * 2 * mLw_p * hSp        # hs_ob   bf16, double-buffered
        + 2 * 4 * mLw_p * nops_p     # output  f32,  double-buffered
        + 4 * mLn_p * hSp            # wa   (f32 intermediate)
        + 2 * 4 * mLw_p * mLn_p      # att + p (f32)
        + 4 * mLw_p * hSp            # c_n  (f32)
        + 2 * mLw_p * 2 * hSp        # [c_n | hs] bf16 concat
        + 4 * mLw_p * hSp            # h1   (f32)
    )
    bb = int(vmem_budget_bytes // max(per_row, 1))
    bb = max(8, min(512, (bb // 8) * 8))
    bb = min(bb, _round_up(bS, 8))
    return max(bb, 8)


def wao_head_pallas(wenc_n, hs_ob, l_n,
                    W_att, b_att, W_c, b_c, W_hs, b_hs, W1, b1, W2, b2,
                    *, block_b=None):
    bS, mLn, hS = wenc_n.shape
    mLw = hs_ob.shape[1]
    nops = W2.shape[0]
    f32, bf16 = jnp.float32, jnp.bfloat16

    # --- algebraic fusion of W_c / W_hs into W1 (no nonlinearity in between) --
    W1c = W1[:, :hS]                       # acts on the W_c(c_n) half of the concat
    W1h = W1[:, hS:]                       # acts on the W_hs(hs) half
    Afused = W_c.T @ W1c.T                 # (hS, hS): c_n @ Afused
    Bfused = W_hs.T @ W1h.T                # (hS, hS): hs  @ Bfused
    b1f = b1 + b_c @ W1c.T + b_hs @ W1h.T  # (hS,)

    # --- padded, lane-dense shapes (seq dims 16-aligned for bf16 packing) ---
    hSp = _round_up(hS, 128)
    mLn_p = _round_up(mLn, 16)
    mLw_p = _round_up(mLw, 16)
    nops_p = _round_up(nops, 128)

    # --- VMEM-aware batch block selection ---
    try:
        vmem_cap = int(pltpu.get_tpu_info().vmem_capacity_bytes)
    except Exception:
        vmem_cap = 64 * 1024 * 1024        # conservative (v7x-sized) fallback
    if block_b is None:
        block_b = _auto_block_b(bS, mLn_p, mLw_p, hSp, nops_p,
                                int(vmem_cap * 0.4))
    BB = block_b
    bS_p = _round_up(bS, BB)
    grid_b = bS_p // BB
    vmem_limit = int(min(vmem_cap * 0.75, 96 * 1024 * 1024))

    # --- host-side padding / dtype prep ---
    # TODO(synk): produce padded bf16 activations directly from the encoder to
    # avoid this extra HBM round trip (bf16 already halves it vs. f32).
    def pad_act(a, b_, s_, f_):
        return jnp.pad(a.astype(bf16), ((0, b_ - a.shape[0]),
                                        (0, s_ - a.shape[1]),
                                        (0, f_ - a.shape[2])))

    x_p = pad_act(wenc_n, bS_p, mLn_p, hSp)
    hs_p = pad_act(hs_ob, bS_p, mLw_p, hSp)

    l_n_i = jnp.asarray(l_n, jnp.int32)
    if bS_p > bS:
        l_n_i = jnp.concatenate(
            [l_n_i, jnp.full((bS_p - bS,), mLn, jnp.int32)])
    l_n_2d = l_n_i.reshape(bS_p, 1)

    def pad_w(w, r, c):
        return jnp.pad(w, ((0, r - w.shape[0]), (0, c - w.shape[1]))).astype(bf16)

    def pad_b(b_, c):
        return jnp.pad(b_, (0, c - b_.shape[0])).astype(f32).reshape(1, c)

    watt_T = pad_w(W_att.T, hSp, hSp)
    # single fused layer-1 RHS: rows [0:hSp] act on c_n, rows [hSp:2hSp] on hs
    w1_f = jnp.concatenate([pad_w(Afused, hSp, hSp),
                            pad_w(Bfused, hSp, hSp)], axis=0)   # (2*hSp, hSp)
    w2_T = pad_w(W2.T, hSp, nops_p)
    batt_p = pad_b(b_att, hSp)
    b1f_p = pad_b(b1f, hSp)
    b2_p = pad_b(b2, nops_p)

    def act_spec(s_, f_):
        return pl.BlockSpec((BB, s_, f_), lambda g: (g, 0, 0))

    def full2(shape):
        return pl.BlockSpec(shape, lambda g: (0, 0))

    in_specs = [
        pl.BlockSpec((BB, 1), lambda g: (g, 0)),    # l_n (int32)
        act_spec(mLn_p, hSp),                       # wenc_n (bf16)
        act_spec(mLw_p, hSp),                       # wenc_hs_ob (bf16)
        full2((hSp, hSp)), full2((1, hSp)),         # W_att^T, b_att
        full2((2 * hSp, hSp)), full2((1, hSp)),     # fused W1, fused b1
        full2((hSp, nops_p)), full2((1, nops_p)),   # W2^T, b2
    ]
    out_spec = pl.BlockSpec((BB, mLw_p, nops_p), lambda g: (g, 0, 0))

    flops = 2 * bS_p * (mLn_p * hSp * hSp            # W_att
                        + mLw_p * mLn_p * hSp        # attention
                        + mLw_p * mLn_p * hSp        # context
                        + mLw_p * 2 * hSp * hSp      # fused layer 1
                        + mLw_p * hSp * nops_p)      # layer 2
    bytes_accessed = ((x_p.size + hs_p.size) * 2 + bS_p * 4
                      + 2 * (hSp * hSp + 2 * hSp * hSp + hSp * nops_p)
                      + 4 * (2 * hSp + nops_p)
                      + bS_p * mLw_p * nops_p * 4)
    cost = pl.CostEstimate(flops=flops,
                           transcendentals=bS_p * mLw_p * (mLn_p + hSp),
                           bytes_accessed=bytes_accessed)

    out = pl.pallas_call(
        wao_head_kernel,
        out_shape=jax.ShapeDtypeStruct((bS_p, mLw_p, nops_p), f32),
        grid_spec=pltpu.PrefetchScalarGridSpec(
            num_scalar_prefetch=0,
            grid=(grid_b,),
            in_specs=in_specs,
            out_specs=out_spec),
        compiler_params=pltpu.CompilerParams(
            dimension_semantics=("parallel",),
            vmem_limit_bytes=vmem_limit),
        cost_estimate=cost,
    )(l_n_2d, x_p, hs_p, watt_T, batt_p, w1_f, b1f_p, w2_T, b2_p)

    return out[:bS, :mLw, :nops]


# -----------------------------------------------------------------------------
# Plain-JAX glue: bidirectional (packed-sequence-equivalent) LSTM encoders.
# TODO(synk): the sequential LSTM recurrence stays in lax.scan (no clean Pallas win).
# -----------------------------------------------------------------------------
def lstm_cell_step(params, x_t, h, c):
    gates = (x_t @ params["W_ih"].T + h @ params["W_hh"].T
             + params["b_ih"] + params["b_hh"])
    i, f, g, o = jnp.split(gates, 4, axis=-1)
    i = jax.nn.sigmoid(i)
    f = jax.nn.sigmoid(f)
    g = jnp.tanh(g)
    o = jax.nn.sigmoid(o)
    c_new = f * c + i * g
    h_new = o * jnp.tanh(c_new)
    return h_new, c_new


def run_lstm_dir(params, x):
    B, T, _ = x.shape
    H = params["W_hh"].shape[1]

    def step(carry, x_t):
        h, c = carry
        h, c = lstm_cell_step(params, x_t, h, c)
        return (h, c), h

    init = (jnp.zeros((B, H), jnp.float32), jnp.zeros((B, H), jnp.float32))
    _, outs = jax.lax.scan(step, init, jnp.swapaxes(x, 0, 1))
    return jnp.swapaxes(outs, 0, 1)        # [B, T, H]


def bilstm_encode(layers, x, lengths):
    """Emulates nn.LSTM(bidirectional=True) on pack_padded_sequence input.
    Outputs at padded positions are zero (as pad_packed_sequence gives)."""
    B, T, _ = x.shape
    t_idx = jnp.arange(T)[None, :]
    valid = (t_idx < lengths[:, None]).astype(jnp.float32)[..., None]   # [B,T,1]
    rev_idx = jnp.clip(lengths[:, None] - 1 - t_idx, 0, T - 1)          # [B,T]

    h = x
    for fwd_p, bwd_p in layers:
        out_f = run_lstm_dir(fwd_p, h) * valid
        h_rev = jnp.take_along_axis(h, rev_idx[..., None], axis=1) * valid
        out_r = run_lstm_dir(bwd_p, h_rev)
        out_b = jnp.take_along_axis(out_r, rev_idx[..., None], axis=1) * valid
        h = jnp.concatenate([out_f, out_b], axis=-1)
    return h                                                            # [B,T,2H]


def encode_hpu_jax(layers, wemb_hpu, l_hpu, l_hs, hS):
    out = bilstm_encode(layers, wemb_hpu, jnp.asarray(l_hpu, jnp.int32))
    last_idx = jnp.asarray(l_hpu, jnp.int32) - 1
    wenc_last = jnp.take_along_axis(out, last_idx[:, None, None], axis=1)[:, 0, :]
    max_hs = max(l_hs)
    rows, st = [], 0
    for lhs1 in l_hs:
        block = wenc_last[st:st + lhs1]
        if lhs1 < max_hs:
            block = jnp.concatenate(
                [block, jnp.zeros((max_hs - lhs1, hS), jnp.float32)], axis=0)
        rows.append(block)
        st += lhs1
    return jnp.stack(rows)       # [bS, max(l_hs), hS]


# -----------------------------------------------------------------------------
# Deterministic parameter construction.
# -----------------------------------------------------------------------------
def linear_params(key, out_dim, in_dim):
    k1, k2 = jax.random.split(key)
    bound = 1.0 / np.sqrt(in_dim)
    W = jax.random.uniform(k1, (out_dim, in_dim), jnp.float32, -bound, bound)
    b = jax.random.uniform(k2, (out_dim,), jnp.float32, -bound, bound)
    return W, b


def lstm_dir_params(key, in_dim, H):
    k1, k2, k3, k4 = jax.random.split(key, 4)
    bound = 1.0 / np.sqrt(H)
    return dict(
        W_ih=jax.random.uniform(k1, (4 * H, in_dim), jnp.float32, -bound, bound),
        W_hh=jax.random.uniform(k2, (4 * H, H), jnp.float32, -bound, bound),
        b_ih=jax.random.uniform(k3, (4 * H,), jnp.float32, -bound, bound),
        b_hh=jax.random.uniform(k4, (4 * H,), jnp.float32, -bound, bound),
    )


def bilstm_params(key, in_dim, H, num_layers):
    layers = []
    for layer in range(num_layers):
        d_in = in_dim if layer == 0 else 2 * H
        key, kf, kb = jax.random.split(key, 3)
        layers.append((lstm_dir_params(kf, d_in, H), lstm_dir_params(kb, d_in, H)))
    return layers


# -----------------------------------------------------------------------------
# Pure-JAX f32 reference of the attention head (for correctness check).
# -----------------------------------------------------------------------------
def reference_head(wenc_n, hs_ob, l_n,
                   W_att, b_att, W_c, b_c, W_hs, b_hs, W1, b1, W2, b2):
    wa = wenc_n @ W_att.T + b_att
    att = jnp.einsum("bnh,bwh->bwn", wa, hs_ob)
    mLn = wenc_n.shape[1]
    mask = jnp.arange(mLn)[None, None, :] < jnp.asarray(l_n, jnp.int32)[:, None, None]
    att = jnp.where(mask, att, -1e10)
    p = jax.nn.softmax(att, axis=2)
    c_n = jnp.einsum("bwn,bnh->bwh", p, wenc_n)
    vec = jnp.concatenate([c_n @ W_c.T + b_c, hs_ob @ W_hs.T + b_hs], axis=2)
    h = jnp.tanh(vec @ W1.T + b1)
    return h @ W2.T + b2


# -----------------------------------------------------------------------------
if __name__ == "__main__":
    # small, shape-consistent config
    iS, hS, lS, n_ops = 16, 32, 2, 7
    H = hS // 2
    bS = 2
    mL_n = 8
    mL_w = 20
    l_n = [8, 6]
    l_hs = [3, 2]
    l_hpu = [2, 3, 4, 2, 3]          # one entry per header (sum over batch)
    mL_hpu = max(l_hpu)
    wn = [2, 1]
    wc = [[0, 2], [1]]

    key = jax.random.PRNGKey(0)
    (k_wn, k_whpu, k_encn, k_ench,
     k_watt, k_wc, k_whs, k_ao1, k_ao2) = jax.random.split(key, 9)

    # module inputs
    wemb_n = jax.random.normal(k_wn, (bS, mL_n, iS), jnp.float32)
    wemb_hpu = jax.random.normal(k_whpu, (len(l_hpu), mL_hpu, iS), jnp.float32)

    # parameters (deterministic)
    enc_n_layers = bilstm_params(k_encn, iS, H, lS)
    enc_h_layers = bilstm_params(k_ench, iS, H, lS)
    W_att, b_att = linear_params(k_watt, hS, hS)
    W_c, b_c = linear_params(k_wc, hS, hS)
    W_hs, b_hs = linear_params(k_whs, hS, hS)
    W1, b1 = linear_params(k_ao1, hS, 2 * hS)
    W2, b2 = linear_params(k_ao2, n_ops, hS)

    # ---- glue: encoders + wenc_hs_ob construction (matches PyTorch loops) ----
    wenc_n = bilstm_encode(enc_n_layers, wemb_n, jnp.asarray(l_n, jnp.int32))
    wenc_hs = encode_hpu_jax(enc_h_layers, wemb_hpu, l_hpu, l_hs, hS)

    idx = np.zeros((bS, mL_w), dtype=np.int32)           # pad rows reuse column 0
    for b in range(bS):
        for i, col in enumerate(wc[b]):
            idx[b, i] = col
    wenc_hs_ob = jnp.take_along_axis(wenc_hs, jnp.asarray(idx)[:, :, None], axis=1)

    # ---- Pallas hot path (block_b auto-selected from VMEM budget) ----
    s_ao = wao_head_pallas(wenc_n, wenc_hs_ob, l_n,
                           W_att, b_att, W_c, b_c, W_hs, b_hs, W1, b1, W2, b2)
    s_ao = jax.block_until_ready(s_ao)

    # correctness check against pure-JAX f32 reference (kernel uses bf16
    # activations/MXU inputs + fused W_c/W_hs, hence the relaxed tolerance).
    s_ref = reference_head(wenc_n, wenc_hs_ob, l_n,
                           W_att, b_att, W_c, b_c, W_hs, b_hs, W1, b1, W2, b2)
    assert s_ao.shape == (bS, mL_w, n_ops)
    np.testing.assert_allclose(np.asarray(s_ao), np.asarray(s_ref),
                               rtol=3e-2, atol=3e-2)
    print("KERNEL_OK")
</pallas_src>

<mosaic_0001>
module attributes {stable_mosaic.version = 11 : i64} {
  func.func @wao_head_kernel(%arg0: i32, %arg1: memref<8x1xi32, #tpu.memory_space<vmem>>, %arg2: memref<8x16x128xbf16, #tpu.memory_space<vmem>>, %arg3: memref<8x32x128xbf16, #tpu.memory_space<vmem>>, %arg4: memref<128x128xbf16, #tpu.memory_space<vmem>>, %arg5: memref<1x128xf32, #tpu.memory_space<vmem>>, %arg6: memref<256x128xbf16, #tpu.memory_space<vmem>>, %arg7: memref<1x128xf32, #tpu.memory_space<vmem>>, %arg8: memref<128x128xbf16, #tpu.memory_space<vmem>>, %arg9: memref<1x128xf32, #tpu.memory_space<vmem>>, %arg10: memref<8x32x128xf32, #tpu.memory_space<vmem>>) attributes {dimension_semantics = [#tpu.dimension_semantics<parallel>], iteration_bounds = array<i64: 1>, scalar_prefetch = 0 : i64, scratch_operands = 0 : i64, tpu.core_type = #tpu.core_type<tc>, window_params = [{transform_indices = @transform_0, window_bounds = array<i64: 8, 1>}, {transform_indices = @transform_1, window_bounds = array<i64: 8, 16, 128>}, {transform_indices = @transform_2, window_bounds = array<i64: 8, 32, 128>}, {pipeline_mode = #tpu.pipeline_mode<synchronous>, transform_indices = @transform_3, window_bounds = array<i64: 128, 128>}, {pipeline_mode = #tpu.pipeline_mode<synchronous>, transform_indices = @transform_4, window_bounds = array<i64: 1, 128>}, {pipeline_mode = #tpu.pipeline_mode<synchronous>, transform_indices = @transform_5, window_bounds = array<i64: 256, 128>}, {pipeline_mode = #tpu.pipeline_mode<synchronous>, transform_indices = @transform_6, window_bounds = array<i64: 1, 128>}, {pipeline_mode = #tpu.pipeline_mode<synchronous>, transform_indices = @transform_7, window_bounds = array<i64: 128, 128>}, {pipeline_mode = #tpu.pipeline_mode<synchronous>, transform_indices = @transform_8, window_bounds = array<i64: 1, 128>}, {transform_indices = @transform_9, window_bounds = array<i64: 8, 32, 128>}]} {
    %c0 = arith.constant 0 : index
    %c0_0 = arith.constant 0 : index
    %c0_1 = arith.constant 0 : index
    %0 = vector.load %arg2[%c0, %c0_0, %c0_1] : memref<8x16x128xbf16, #tpu.memory_space<vmem>>, vector<8x16x128xbf16>
    %c0_2 = arith.constant 0 : index
    %c0_3 = arith.constant 0 : index
    %c0_4 = arith.constant 0 : index
    %1 = vector.load %arg3[%c0_2, %c0_3, %c0_4] : memref<8x32x128xbf16, #tpu.memory_space<vmem>>, vector<8x32x128xbf16>
    %2 = vector.shape_cast %0 : vector<8x16x128xbf16> to vector<128x128xbf16>
    %c0_5 = arith.constant 0 : index
    %c0_6 = arith.constant 0 : index
    %3 = vector.load %arg4[%c0_5, %c0_6] : memref<128x128xbf16, #tpu.memory_space<vmem>>, vector<128x128xbf16>
    %cst = arith.constant dense<0.000000e+00> : vector<128x128xf32>
    %4 = tpu.matmul %2, %3, %cst {dimension_numbers = #tpu.dot_dimension_numbers<[1], [0], [0], [1], [0, 0, 1, 1], [], []>} : vector<128x128xbf16>, vector<128x128xbf16>, vector<128x128xf32> -> vector<128x128xf32>
    %c0_7 = arith.constant 0 : index
    %c0_8 = arith.constant 0 : index
    %5 = vector.load %arg5[%c0_7, %c0_8] : memref<1x128xf32, #tpu.memory_space<vmem>>, vector<1x128xf32>
    %6 = vector.broadcast %5 : vector<1x128xf32> to vector<128x128xf32>
    %7 = arith.addf %4, %6 : vector<128x128xf32>
    %8 = vector.shape_cast %7 : vector<128x128xf32> to vector<8x16x128xf32>
    %9 = arith.truncf %8 : vector<8x16x128xf32> to vector<8x16x128xbf16>
    "tpu.trace_start"() <{level = 10 : i32, message = "bwh,bnh->bwn"}> : () -> ()
    %cst_9 = arith.constant dense<0.000000e+00> : vector<8x32x16xf32>
    %10 = tpu.matmul %1, %9, %cst_9 {dimension_numbers = #tpu.dot_dimension_numbers<[2], [2], [1], [1], [0, 0, 0, 1, 1, 1], [0], [0]>} : vector<8x32x128xbf16>, vector<8x16x128xbf16>, vector<8x32x16xf32> -> vector<8x32x16xf32>
    "tpu.trace_stop"() : () -> ()
    %c0_10 = arith.constant 0 : index
    %c0_11 = arith.constant 0 : index
    %11 = vector.load %arg1[%c0_10, %c0_11] : memref<8x1xi32, #tpu.memory_space<vmem>>, vector<8x1xi32>
    %12 = vector.shape_cast %11 : vector<8x1xi32> to vector<8x1x1xi32>
    %13 = tpu.iota {dimensions = array<i32: 2>} : vector<8x32x16xi32>
    %14 = vector.broadcast %12 : vector<8x1x1xi32> to vector<8x32x16xi32>
    %15 = arith.cmpi slt, %13, %14 : vector<8x32x16xi32>
    %cst_12 = arith.constant -1.000000e+10 : f32
    %16 = vector.broadcast %cst_12 : f32 to vector<8x32x16xf32>
    %17 = arith.select %15, %10, %16 : vector<8x32x16xi1>, vector<8x32x16xf32>
    %cst_13 = arith.constant dense<0xFF800000> : vector<8x32xf32>
    %18 = vector.multi_reduction <maximumf>, %17, %cst_13 [2] : vector<8x32x16xf32> to vector<8x32xf32>
    %19 = vector.shape_cast %18 : vector<8x32xf32> to vector<8x32x1xf32>
    %20 = vector.broadcast %19 : vector<8x32x1xf32> to vector<8x32x16xf32>
    %21 = arith.subf %17, %20 : vector<8x32x16xf32>
    %22 = math.exp %21 : vector<8x32x16xf32>
    %cst_14 = arith.constant dense<0.000000e+00> : vector<8x32xf32>
    %23 = vector.multi_reduction <add>, %22, %cst_14 [2] : vector<8x32x16xf32> to vector<8x32xf32>
    %24 = vector.shape_cast %23 : vector<8x32xf32> to vector<8x32x1xf32>
    %25 = tpu.reciprocal %24 {approx = true} : vector<8x32x1xf32> -> vector<8x32x1xf32>
    %26 = vector.broadcast %25 : vector<8x32x1xf32> to vector<8x32x16xf32>
    %27 = arith.mulf %22, %26 : vector<8x32x16xf32>
    %28 = arith.truncf %27 : vector<8x32x16xf32> to vector<8x32x16xbf16>
    "tpu.trace_start"() <{level = 10 : i32, message = "bwn,bnh->bwh"}> : () -> ()
    %cst_15 = arith.constant dense<0.000000e+00> : vector<8x32x128xf32>
    %29 = tpu.matmul %28, %0, %cst_15 {dimension_numbers = #tpu.dot_dimension_numbers<[2], [1], [1], [2], [0, 0, 0, 1, 1, 2], [0], [0]>} : vector<8x32x16xbf16>, vector<8x16x128xbf16>, vector<8x32x128xf32> -> vector<8x32x128xf32>
    "tpu.trace_stop"() : () -> ()
    %30 = vector.shape_cast %29 : vector<8x32x128xf32> to vector<256x128xf32>
    %31 = arith.truncf %30 : vector<256x128xf32> to vector<256x128xbf16>
    %32 = vector.shape_cast %1 : vector<8x32x128xbf16> to vector<256x128xbf16>
    %33 = tpu.concatenate %31, %32 in 1 : vector<256x128xbf16>, vector<256x128xbf16> -> vector<256x256xbf16>
    %c0_16 = arith.constant 0 : index
    %c0_17 = arith.constant 0 : index
    %34 = vector.load %arg6[%c0_16, %c0_17] : memref<256x128xbf16, #tpu.memory_space<vmem>>, vector<256x128xbf16>
    %cst_18 = arith.constant dense<0.000000e+00> : vector<256x128xf32>
    %35 = tpu.matmul %33, %34, %cst_18 {dimension_numbers = #tpu.dot_dimension_numbers<[1], [0], [0], [1], [0, 0, 1, 1], [], []>} : vector<256x256xbf16>, vector<256x128xbf16>, vector<256x128xf32> -> vector<256x128xf32>
    %c0_19 = arith.constant 0 : index
    %c0_20 = arith.constant 0 : index
    %36 = vector.load %arg7[%c0_19, %c0_20] : memref<1x128xf32, #tpu.memory_space<vmem>>, vector<1x128xf32>
    %37 = vector.broadcast %36 : vector<1x128xf32> to vector<256x128xf32>
    %38 = arith.addf %35, %37 : vector<256x128xf32>
    %39 = math.tanh %38 : vector<256x128xf32>
    %40 = arith.truncf %39 : vector<256x128xf32> to vector<256x128xbf16>
    %c0_21 = arith.constant 0 : index
    %c0_22 = arith.constant 0 : index
    %41 = vector.load %arg8[%c0_21, %c0_22] : memref<128x128xbf16, #tpu.memory_space<vmem>>, vector<128x128xbf16>
    %cst_23 = arith.constant dense<0.000000e+00> : vector<256x128xf32>
    %42 = tpu.matmul %40, %41, %cst_23 {dimension_numbers = #tpu.dot_dimension_numbers<[1], [0], [0], [1], [0, 0, 1, 1], [], []>} : vector<256x128xbf16>, vector<128x128xbf16>, vector<256x128xf32> -> vector<256x128xf32>
    %c0_24 = arith.constant 0 : index
    %c0_25 = arith.constant 0 : index
    %43 = vector.load %arg9[%c0_24, %c0_25] : memref<1x128xf32, #tpu.memory_space<vmem>>, vector<1x128xf32>
    %44 = vector.broadcast %43 : vector<1x128xf32> to vector<256x128xf32>
    %45 = arith.addf %42, %44 : vector<256x128xf32>
    %46 = vector.shape_cast %45 : vector<256x128xf32> to vector<8x32x128xf32>
    %c0_26 = arith.constant 0 : index
    %c0_27 = arith.constant 0 : index
    %c0_28 = arith.constant 0 : index
    %47 = vector.load %arg10[%c0_26, %c0_27, %c0_28] : memref<8x32x128xf32, #tpu.memory_space<vmem>>, vector<8x32x128xf32>
    tpu.vector_store %arg10[%c0_26, %c0_27, %c0_28], %46 {strides = array<i32>} : memref<8x32x128xf32, #tpu.memory_space<vmem>>, vector<8x32x128xf32>,
    return
  }
  func.func @transform_0(%arg0: i32) -> (i32, i32) {
    %c0_i32 = arith.constant 0 : i32
    %c0_i32_0 = arith.constant 0 : i32
    return %arg0, %c0_i32 : i32, i32
  }
  func.func @transform_1(%arg0: i32) -> (i32, i32, i32) {
    %c0_i32 = arith.constant 0 : i32
    %c0_i32_0 = arith.constant 0 : i32
    %c0_i32_1 = arith.constant 0 : i32
    return %arg0, %c0_i32, %c0_i32_0 : i32, i32, i32
  }
  func.func @transform_2(%arg0: i32) -> (i32, i32, i32) {
    %c0_i32 = arith.constant 0 : i32
    %c0_i32_0 = arith.constant 0 : i32
    %c0_i32_1 = arith.constant 0 : i32
    return %arg0, %c0_i32, %c0_i32_0 : i32, i32, i32
  }
  func.func @transform_3(%arg0: i32) -> (i32, i32) {
    %c0_i32 = arith.constant 0 : i32
    %c0_i32_0 = arith.constant 0 : i32
    %c0_i32_1 = arith.constant 0 : i32
    return %c0_i32, %c0_i32_0 : i32, i32
  }
  func.func @transform_4(%arg0: i32) -> (i32, i32) {
    %c0_i32 = arith.constant 0 : i32
    %c0_i32_0 = arith.constant 0 : i32
    %c0_i32_1 = arith.constant 0 : i32
    return %c0_i32, %c0_i32_0 : i32, i32
  }
  func.func @transform_5(%arg0: i32) -> (i32, i32) {
    %c0_i32 = arith.constant 0 : i32
    %c0_i32_0 = arith.constant 0 : i32
    %c0_i32_1 = arith.constant 0 : i32
    return %c0_i32, %c0_i32_0 : i32, i32
  }
  func.func @transform_6(%arg0: i32) -> (i32, i32) {
    %c0_i32 = arith.constant 0 : i32
    %c0_i32_0 = arith.constant 0 : i32
    %c0_i32_1 = arith.constant 0 : i32
    return %c0_i32, %c0_i32_0 : i32, i32
  }
  func.func @transform_7(%arg0: i32) -> (i32, i32) {
    %c0_i32 = arith.constant 0 : i32
    %c0_i32_0 = arith.constant 0 : i32
    %c0_i32_1 = arith.constant 0 : i32
    return %c0_i32, %c0_i32_0 : i32, i32
  }
  func.func @transform_8(%arg0: i32) -> (i32, i32) {
    %c0_i32 = arith.constant 0 : i32
    %c0_i32_0 = arith.constant 0 : i32
    %c0_i32_1 = arith.constant 0 : i32
    return %c0_i32, %c0_i32_0 : i32, i32
  }
  func.func @transform_9(%arg0: i32) -> (i32, i32, i32) {
    %c0_i32 = arith.constant 0 : i32
    %c0_i32_0 = arith.constant 0 : i32
    %c0_i32_1 = arith.constant 0 : i32
    return %arg0, %c0_i32, %c0_i32_0 : i32, i32, i32
  }
}

</mosaic_0001>

<llo_original>
// kernel: tpu_custom_call.1
$region0: #{tpu_custom_call.1}
  #allocation0 [shape = 'u32[]', space=smem, size = 0x4, offset = 0x4, fixed_abs, tag = 'smem constant byte address 0x4 - core index']
  #allocation1 [shape = 'u32[144,128]{1,0:T(1,128)}', space=vmem, size = 0x12000, scoped, tag = 'internal scratch']
  %s0 = inlined_call_operand.vmem [shape: s32[8,1], index: 0, kind: input, shape index: {}]
  %s1 = inlined_call_operand.hbm [shape: bf16[8,16,128], index: 1, kind: input, shape index: {}]
  %s2 = inlined_call_operand.hbm [shape: bf16[8,32,128], index: 2, kind: input, shape index: {}]
  %s3 = inlined_call_operand.hbm [shape: bf16[128,128], index: 3, kind: input, shape index: {}]
  %s4 = inlined_call_operand.vmem [shape: f32[1,128], index: 4, kind: input, shape index: {}]
  %s5 = inlined_call_operand.hbm [shape: bf16[256,128], index: 5, kind: input, shape index: {}]
  %s6 = inlined_call_operand.vmem [shape: f32[1,128], index: 6, kind: input, shape index: {}]
  %s7 = inlined_call_operand.hbm [shape: bf16[128,128], index: 7, kind: input, shape index: {}]
  %s8 = inlined_call_operand.vmem [shape: f32[1,128], index: 8, kind: input, shape index: {}]
  %s9 = inlined_call_operand.hbm [shape: f32[8,32,128], index: 9, kind: output, shape index: {}]
  %s10 = sld [smem:[#allocation0]]
  $region66: #{tpu_custom_call.1} parent=0
    _
  %s12 = ssub.s32 1, %s10
  %s13 = scalar_select 0, %s12, %s10
  $region1: #{tpu_custom_call.1} parent=0
    #allocation2 [shape = 'u8[32768]{0}', space=vmem, size = 0x8000, scoped, tag = 'input window, operand 1, single buffered']
    #allocation3 [shape = 's32[1]{0}', space=sflag, size = 0x4, scoped, tag = 'scoped memory for tpu_custom_call.1']
    #allocation4 [shape = 's32[1]{0}', space=sflag, size = 0x4, scoped, tag = 'scoped memory for tpu_custom_call.1']
    #allocation5 [shape = 'u8[65536]{0}', space=vmem, size = 0x10000, scoped, tag = 'input window, operand 2, single buffered']
    #allocation6 [shape = 's32[1]{0}', space=sflag, size = 0x4, scoped, tag = 'scoped memory for tpu_custom_call.1']
    #allocation7 [shape = 'u8[32768]{0}', space=vmem, size = 0x8000, scoped, tag = 'input window, operand 3, single buffered']
    #allocation8 [shape = 'u8[65536]{0}', space=vmem, size = 0x10000, scoped, tag = 'input window, operand 5, single buffered']
    #allocation9 [shape = 's32[1]{0}', space=sflag, size = 0x4, scoped, tag = 'scoped memory for tpu_custom_call.1']
    #allocation10 [shape = 'u8[32768]{0}', space=vmem, size = 0x8000, scoped, tag = 'input window, operand 7, single buffered']
    #allocation11 [shape = 'u8[131072]{0}', space=vmem, size = 0x20000, scoped, tag = 'output window, operand 0, single buffered']
    %14 = vsyncpa [#allocation3], 0
    %15 = vsyncpa [#allocation6], 0
    %16 = vsyncpa [#allocation9], 0
    %17 = vsyncpa [#allocation4], 0
    // Predicated region
    $region2: #{tpu_custom_call.1} parent=1 // pred_check
      _
    $region3: #{tpu_custom_call.1} parent=1 // pred_check_branch
      %19 = sbr.rel (0) target = $region5
    $region4: #{tpu_custom_call.1} parent=1 // pred_region
      _
    $region5: #{tpu_custom_call.1} parent=1 // pred_fallthru
      _
    // Predicated region
    $region6: #{tpu_custom_call.1} parent=1 // pred_check
      _
    $region7: #{tpu_custom_call.1} parent=1 // pred_check_branch
      %21 = sbr.rel (0) target = $region9
    $region8: #{tpu_custom_call.1} parent=1 // pred_region
      %s23 = ssub.s32 1024, 1024
      %24 = vsyncadd [#allocation3], %s23
      %s25 = sshll.u32 [#allocation2], 4
      %s26 = int_to_ptr.vmem [resolvable:$true] %s25
      %31 = dma.hbm_to_vmem [thread:$0]  %s1, 1024, %s26, [#allocation3], 64, 64, 4
    $region9: #{tpu_custom_call.1} parent=1 // pred_fallthru
      _
    // Predicated region
    $region10: #{tpu_custom_call.1} parent=1 // pred_check
      _
    $region11: #{tpu_custom_call.1} parent=1 // pred_check_branch
      %33 = sbr.rel (0) target = $region13
    $region12: #{tpu_custom_call.1} parent=1 // pred_region
      %s35 = ssub.s32 2048, 2048
      %36 = vsyncadd [#allocation6], %s35
      %s37 = sshll.u32 [#allocation5], 4
      %s38 = int_to_ptr.vmem [resolvable:$true] %s37
      %43 = dma.hbm_to_vmem [thread:$0]  %s2, 2048, %s38, [#allocation6], 64, 64, 4
    $region13: #{tpu_custom_call.1} parent=1 // pred_fallthru
      _
    // Predicated region
    $region14: #{tpu_custom_call.1} parent=1 // pred_check
      _
    $region15: #{tpu_custom_call.1} parent=1 // pred_check_branch
      %45 = sbr.rel (0) target = $region17
    $region16: #{tpu_custom_call.1} parent=1 // pred_region
      %s47 = ssub.s32 1024, 1024
      %48 = vsyncadd [#allocation6], %s47
      %s49 = sshll.u32 [#allocation7], 4
      %s50 = int_to_ptr.vmem [resolvable:$true] %s49
      %55 = dma.hbm_to_vmem [thread:$0]  %s3, 1024, %s50, [#allocation6], 64, 64, 4
    $region17: #{tpu_custom_call.1} parent=1 // pred_fallthru
      _
    // Predicated region
    $region18: #{tpu_custom_call.1} parent=1 // pred_check
      _
    $region19: #{tpu_custom_call.1} parent=1 // pred_check_branch
      %57 = sbr.rel (0) target = $region21
    $region20: #{tpu_custom_call.1} parent=1 // pred_region
      _
    $region21: #{tpu_custom_call.1} parent=1 // pred_fallthru
      _
    // Predicated region
    $region22: #{tpu_custom_call.1} parent=1 // pred_check
      _
    $region23: #{tpu_custom_call.1} parent=1 // pred_check_branch
      %59 = sbr.rel (0) target = $region25
    $region24: #{tpu_custom_call.1} parent=1 // pred_region
      %s61 = ssub.s32 2048, 2048
      %62 = vsyncadd [#allocation9], %s61
      %s63 = sshll.u32 [#allocation8], 4
      %s64 = int_to_ptr.vmem [resolvable:$true] %s63
      %69 = dma.hbm_to_vmem [thread:$0]  %s5, 2048, %s64, [#allocation9], 64, 64, 4
    $region25: #{tpu_custom_call.1} parent=1 // pred_fallthru
      _
    // Predicated region
    $region26: #{tpu_custom_call.1} parent=1 // pred_check
      _
    $region27: #{tpu_custom_call.1} parent=1 // pred_check_branch
      %71 = sbr.rel (0) target = $region29
    $region28: #{tpu_custom_call.1} parent=1 // pred_region
      _
    $region29: #{tpu_custom_call.1} parent=1 // pred_fallthru
      _
    // Predicated region
    $region30: #{tpu_custom_call.1} parent=1 // pred_check
      _
    $region31: #{tpu_custom_call.1} parent=1 // pred_check_branch
      %73 = sbr.rel (0) target = $region33
    $region32: #{tpu_custom_call.1} parent=1 // pred_region
      %s75 = ssub.s32 1024, 1024
      %76 = vsyncadd [#allocation9], %s75
      %s77 = sshll.u32 [#allocation10], 4
      %s78 = int_to_ptr.vmem [resolvable:$true] %s77
      %83 = dma.hbm_to_vmem [thread:$0]  %s7, 1024, %s78, [#allocation9], 64, 64, 4
    $region33: #{tpu_custom_call.1} parent=1 // pred_fallthru
      _
    // Predicated region
    $region34: #{tpu_custom_call.1} parent=1 // pred_check
      _
    $region35: #{tpu_custom_call.1} parent=1 // pred_check_branch
      %85 = sbr.rel (0) target = $region37
    $region36: #{tpu_custom_call.1} parent=1 // pred_region
      _
    $region37: #{tpu_custom_call.1} parent=1 // pred_fallthru
      _
    // Predicated region
    $region38: #{tpu_custom_call.1} parent=1 // pred_check
      _
    $region39: #{tpu_custom_call.1} parent=1 // pred_check_branch
      %87 = sbr.rel (0) target = $region41
    $region40: #{tpu_custom_call.1} parent=1 // pred_region
      %88 = dma.done [#allocation3], 1024
    $region41: #{tpu_custom_call.1} parent=1 // pred_fallthru
      _
    // Predicated region
    $region42: #{tpu_custom_call.1} parent=1 // pred_check
      _
    $region43: #{tpu_custom_call.1} parent=1 // pred_check_branch
      %90 = sbr.rel (0) target = $region45
    $region44: #{tpu_custom_call.1} parent=1 // pred_region
      %91 = dma.done [#allocation6], 2048
    $region45: #{tpu_custom_call.1} parent=1 // pred_fallthru
      _
    // Predicated region
    $region46: #{tpu_custom_call.1} parent=1 // pred_check
      _
    $region47: #{tpu_custom_call.1} parent=1 // pred_check_branch
      %93 = sbr.rel (0) target = $region49
    $region48: #{tpu_custom_call.1} parent=1 // pred_region
      %94 = dma.done [#allocation6], 1024
    $region49: #{tpu_custom_call.1} parent=1 // pred_fallthru
      _
    // Predicated region
    $region50: #{tpu_custom_call.1} parent=1 // pred_check
      _
    $region51: #{tpu_custom_call.1} parent=1 // pred_check_branch
      %96 = sbr.rel (0) target = $region53
    $region52: #{tpu_custom_call.1} parent=1 // pred_region
      %97 = dma.done [#allocation9], 2048
    $region53: #{tpu_custom_call.1} parent=1 // pred_fallthru
      _
    // Predicated region
    $region54: #{tpu_custom_call.1} parent=1 // pred_check
      _
    $region55: #{tpu_custom_call.1} parent=1 // pred_check_branch
      %99 = sbr.rel (0) target = $region57
    $region56: #{tpu_custom_call.1} parent=1 // pred_region
      %100 = dma.done [#allocation9], 1024
    $region57: #{tpu_custom_call.1} parent=1 // pred_fallthru
      _
    %v102 = vld [vmem:[#allocation2] sm:$0xf]
    %v103 = vld [vmem:[#allocation2 + $0x4] sm:$0xf]
    %v104 = vld [vmem:[#allocation2 + $0x8] sm:$0xf]
    %v105 = vld [vmem:[#allocation2 + $0xc] sm:$0xf]
    %v106 = vld [vmem:[#allocation2 + $0x10] sm:$0xf]
    %v107 = vld [vmem:[#allocation2 + $0x14] sm:$0xf]
    %v108 = vld [vmem:[#allocation2 + $0x18] sm:$0xf]
    %v109 = vld [vmem:[#allocation2 + $0x1c] sm:$0xf]
    %v110 = vld [vmem:[#allocation2 + $0x20] sm:$0xf]
    %v111 = vld [vmem:[#allocation2 + $0x24] sm:$0xf]
    %v112 = vld [vmem:[#allocation2 + $0x28] sm:$0xf]
    %v113 = vld [vmem:[#allocation2 + $0x2c] sm:$0xf]
    %v114 = vld [vmem:[#allocation2 + $0x30] sm:$0xf]
    %v115 = vld [vmem:[#allocation2 + $0x34] sm:$0xf]
    %v116 = vld [vmem:[#allocation2 + $0x38] sm:$0xf]
    %v117 = vld [vmem:[#allocation2 + $0x3c] sm:$0xf]
    %v118 = vld [vmem:[#allocation5] sm:$0xf]
    %v119 = vld [vmem:[#allocation5 + $0x4] sm:$0xf]
    %v120 = vld [vmem:[#allocation5 + $0x8] sm:$0xf]
    %v121 = vld [vmem:[#allocation5 + $0xc] sm:$0xf]
    %v122 = vld [vmem:[#allocation5 + $0x10] sm:$0xf]
    %v123 = vld [vmem:[#allocation5 + $0x14] sm:$0xf]
    %v124 = vld [vmem:[#allocation5 + $0x18] sm:$0xf]
    %v125 = vld [vmem:[#allocation5 + $0x1c] sm:$0xf]
    %v126 = vld [vmem:[#allocation5 + $0x20] sm:$0xf]
    %v127 = vld [vmem:[#allocation5 + $0x24] sm:$0xf]
    %v128 = vld [vmem:[#allocation5 + $0x28] sm:$0xf]
    %v129 = vld [vmem:[#allocation5 + $0x2c] sm:$0xf]
    %v130 = vld [vmem:[#allocation5 + $0x30] sm:$0xf]
    %v131 = vld [vmem:[#allocation5 + $0x34] sm:$0xf]
    %v132 = vld [vmem:[#allocation5 + $0x38] sm:$0xf]
    %v133 = vld [vmem:[#allocation5 + $0x3c] sm:$0xf]
    %v134 = vld [vmem:[#allocation5 + $0x40] sm:$0xf]
    %v135 = vld [vmem:[#allocation5 + $0x44] sm:$0xf]
    %v136 = vld [vmem:[#allocation5 + $0x48] sm:$0xf]
    %v137 = vld [vmem:[#allocation5 + $0x4c] sm:$0xf]
    %v138 = vld [vmem:[#allocation5 + $0x50] sm:$0xf]
    %v139 = vld [vmem:[#allocation5 + $0x54] sm:$0xf]
    %v140 = vld [vmem:[#allocation5 + $0x58] sm:$0xf]
    %v141 = vld [vmem:[#allocation5 + $0x5c] sm:$0xf]
    %v142 = vld [vmem:[#allocation5 + $0x60] sm:$0xf]
    %v143 = vld [vmem:[#allocation5 + $0x64] sm:$0xf]
    %v144 = vld [vmem:[#allocation5 + $0x68] sm:$0xf]
    %v145 = vld [vmem:[#allocation5 + $0x6c] sm:$0xf]
    %v146 = vld [vmem:[#allocation5 + $0x70] sm:$0xf]
    %v147 = vld [vmem:[#allocation5 + $0x74] sm:$0xf]
    %v148 = vld [vmem:[#allocation5 + $0x78] sm:$0xf]
    %v149 = vld [vmem:[#allocation5 + $0x7c] sm:$0xf]
    %v150 = vld [vmem:[#allocation7] sm:$0xf]
    %v151 = vld [vmem:[#allocation7 + $0x4] sm:$0xf]
    %v152 = vld [vmem:[#allocation7 + $0x8] sm:$0xf]
    %v153 = vld [vmem:[#allocation7 + $0xc] sm:$0xf]
    %v154 = vld [vmem:[#allocation7 + $0x10] sm:$0xf]
    %v155 = vld [vmem:[#allocation7 + $0x14] sm:$0xf]
    %v156 = vld [vmem:[#allocation7 + $0x18] sm:$0xf]
    %v157 = vld [vmem:[#allocation7 + $0x1c] sm:$0xf]
    %v158 = vld [vmem:[#allocation7 + $0x20] sm:$0xf]
    %v159 = vld [vmem:[#allocation7 + $0x24] sm:$0xf]
    %v160 = vld [vmem:[#allocation7 + $0x28] sm:$0xf]
    %v161 = vld [vmem:[#allocation7 + $0x2c] sm:$0xf]
    %v162 = vld [vmem:[#allocation7 + $0x30] sm:$0xf]
    %v163 = vld [vmem:[#allocation7 + $0x34] sm:$0xf]
    %v164 = vld [vmem:[#allocation7 + $0x38] sm:$0xf]
    %v165 = vld [vmem:[#allocation7 + $0x3c] sm:$0xf]
    %v166 = vld [vmem:[%s4] sm:$0x1]
    %v168 = vlaneseq
    %v169 = vshrl.u32 %v168, 7
    %v170 = vsub.s32 0, %v169
    %v171 = vrot.slane %v166, %v170
    %v189 = vunpack.c.l.b16 %v102
    %v190 = vunpack.c.l.b16 %v103
    %v191 = vunpack.c.l.b16 %v104
    %v192 = vunpack.c.l.b16 %v105
    %v193 = vunpack.c.l.b16 %v106
    %v194 = vunpack.c.l.b16 %v107
    %v195 = vunpack.c.l.b16 %v108
    %v196 = vunpack.c.l.b16 %v109
    %v197 = vunpack.c.l.b16 %v110
    %v198 = vunpack.c.l.b16 %v111
    %v199 = vunpack.c.l.b16 %v112
    %v200 = vunpack.c.l.b16 %v113
    %v201 = vunpack.c.l.b16 %v114
    %v202 = vunpack.c.l.b16 %v115
    %v203 = vunpack.c.l.b16 %v116
    %v204 = vunpack.c.l.b16 %v117
    %v205 = vpack.c.b16 %v190, %v189
    %v206 = vpack.c.b16 %v192, %v191
    %v207 = vpack.c.b16 %v194, %v193
    %v208 = vpack.c.b16 %v196, %v195
    %v209 = vpack.c.b16 %v198, %v197
    %v210 = vpack.c.b16 %v200, %v199
    %v211 = vpack.c.b16 %v202, %v201
    %v212 = vpack.c.b16 %v204, %v203
    %v237 = vunpack.c.l.b16 %v150
    %v238 = vunpack.c.l.b16 %v151
    %v239 = vunpack.c.l.b16 %v152
    %v240 = vunpack.c.l.b16 %v153
    %v241 = vunpack.c.l.b16 %v154
    %v242 = vunpack.c.l.b16 %v155
    %v243 = vunpack.c.l.b16 %v156
    %v244 = vunpack.c.l.b16 %v157
    %v245 = vunpack.c.l.b16 %v158
    %v246 = vunpack.c.l.b16 %v159
    %v247 = vunpack.c.l.b16 %v160
    %v248 = vunpack.c.l.b16 %v161
    %v249 = vunpack.c.l.b16 %v162
    %v250 = vunpack.c.l.b16 %v163
    %v251 = vunpack.c.l.b16 %v164
    %v252 = vunpack.c.l.b16 %v165
    %v253 = vpack.c.b16 %v238, %v237
    %v254 = vpack.c.b16 %v240, %v239
    %v255 = vpack.c.b16 %v242, %v241
    %v256 = vpack.c.b16 %v244, %v243
    %v257 = vpack.c.b16 %v246, %v245
    %v258 = vpack.c.b16 %v248, %v247
    %v259 = vpack.c.b16 %v250, %v249
    %v260 = vpack.c.b16 %v252, %v251
    %269 = vmatprep.subr.bf16.mxu0 0
    %270 = vmatpush1.bf16.msra.mxu0 %v253
    %271 = vmatprep.subr.bf16.mxu0 0
    %272 = vmatpush1.bf16.msra.mxu0 %v254
    %273 = vmatprep.subr.bf16.mxu0 0
    %274 = vmatpush1.bf16.msra.mxu0 %v255
    %275 = vmatprep.subr.bf16.mxu0 0
    %276 = vmatpush1.bf16.msra.mxu0 %v256
    %277 = vmatprep.subr.bf16.mxu0 0
    %278 = vmatpush1.bf16.msra.mxu0 %v257
    %279 = vmatprep.subr.bf16.mxu0 0
    %280 = vmatpush1.bf16.msra.mxu0 %v258
    %281 = vmatprep.subr.bf16.mxu0 0
    %282 = vmatpush1.bf16.msra.mxu0 %v259
    %283 = vmatprep.subr.bf16.mxu0 0
    %284 = vmatpush1.bf16.msra.mxu0 %v260
    %285 = vmatprep.subr.bf16.mxu0 0
    %286 = vmatpush1.bf16.msra.mxu0 0
    %287 = vmatprep.subr.bf16.mxu0 0
    %288 = vmatpush1.bf16.msra.mxu0 0
    %289 = vmatprep.subr.bf16.mxu0 0
    %290 = vmatpush1.bf16.msra.mxu0 0
    %291 = vmatprep.subr.bf16.mxu0 0
    %292 = vmatpush1.bf16.msra.mxu0 0
    %293 = vmatprep.subr.bf16.mxu0 0
    %294 = vmatpush1.bf16.msra.mxu0 0
    %295 = vmatprep.subr.bf16.mxu0 0
    %296 = vmatpush1.bf16.msra.mxu0 0
    %297 = vmatprep.subr.bf16.mxu0 0
    %298 = vmatpush1.bf16.msra.mxu0 0
    %299 = vmatprep.subr.bf16.mxu0 0
    %300 = vmatpush1.bf16.msra.mxu0 0
    %301 = vmatprep.mubr.bf16.mxu0 0
    %302 = vmatmul.mubr.bf16.gmra.mrb[0].mxu0 %v205
    %v303 = vpop.f32.mrb[0].mxu0
    %v304 = vadd.f32 %v171, %v303
    %v305 = vpop.f32.mrb[0].mxu0
    %v306 = vpop.f32.mrb[0].mxu0
    %v307 = vadd.f32 %v171, %v306
    %v308 = vpop.f32.mrb[0].mxu0
    %309 = vmatprep.mubr.bf16.mxu0 0
    %310 = vmatmul.mubr.bf16.gmra.mrb[0].mxu0 %v206
    %v311 = vpop.f32.mrb[0].mxu0
    %v312 = vadd.f32 %v171, %v311
    %v313 = vpop.f32.mrb[0].mxu0
    %v314 = vpop.f32.mrb[0].mxu0
    %v315 = vadd.f32 %v171, %v314
    %v316 = vpop.f32.mrb[0].mxu0
    %317 = vmatprep.mubr.bf16.mxu0 0
    %318 = vmatmul.mubr.bf16.gmra.mrb[0].mxu0 %v207
    %v319 = vpop.f32.mrb[0].mxu0
    %v320 = vadd.f32 %v171, %v319
    %v321 = vpop.f32.mrb[0].mxu0
    %v322 = vpop.f32.mrb[0].mxu0
    %v323 = vadd.f32 %v171, %v322
    %v324 = vpop.f32.mrb[0].mxu0
    %325 = vmatprep.mubr.bf16.mxu0 0
    %326 = vmatmul.mubr.bf16.gmra.mrb[0].mxu0 %v208
    %v327 = vpop.f32.mrb[0].mxu0
    %v328 = vadd.f32 %v171, %v327
    %v329 = vpop.f32.mrb[0].mxu0
    %v330 = vpop.f32.mrb[0].mxu0
    %v331 = vadd.f32 %v171, %v330
    %v332 = vpop.f32.mrb[0].mxu0
    %333 = vmatprep.mubr.bf16.mxu0 0
    %334 = vmatmul.mubr.bf16.gmra.mrb[0].mxu0 %v209
    %v335 = vpop.f32.mrb[0].mxu0
    %v336 = vadd.f32 %v171, %v335
    %v337 = vpop.f32.mrb[0].mxu0
    %v338 = vpop.f32.mrb[0].mxu0
    %v339 = vadd.f32 %v171, %v338
    %v340 = vpop.f32.mrb[0].mxu0
    %341 = vmatprep.mubr.bf16.mxu0 0
    %342 = vmatmul.mubr.bf16.gmra.mrb[0].mxu0 %v210
    %v343 = vpop.f32.mrb[0].mxu0
    %v344 = vadd.f32 %v171, %v343
    %v345 = vpop.f32.mrb[0].mxu0
    %v346 = vpop.f32.mrb[0].mxu0
    %v347 = vadd.f32 %v171, %v346
    %v348 = vpop.f32.mrb[0].mxu0
    %349 = vmatprep.mubr.bf16.mxu0 0
    %350 = vmatmul.mubr.bf16.gmra.mrb[0].mxu0 %v211
    %v351 = vpop.f32.mrb[0].mxu0
    %v352 = vadd.f32 %v171, %v351
    %v353 = vpop.f32.mrb[0].mxu0
    %v354 = vpop.f32.mrb[0].mxu0
    %v355 = vadd.f32 %v171, %v354
    %v356 = vpop.f32.mrb[0].mxu0
    %357 = vmatprep.mubr.bf16.mxu0 0
    %358 = vmatmul.mubr.bf16.gmra.mrb[0].mxu0 %v212
    %v359 = vpop.f32.mrb[0].mxu0
    %v360 = vadd.f32 %v171, %v359
    %v361 = vpop.f32.mrb[0].mxu0
    %v362 = vpop.f32.mrb[0].mxu0
    %v363 = vadd.f32 %v171, %v362
    %v364 = vpop.f32.mrb[0].mxu0
    %365 = vdwg.mxu0
    %v366 = vpack.c.bf16 %v307, %v304
    %v367 = vpack.c.bf16 %v315, %v312
    %v368 = vpack.c.bf16 %v323, %v320
    %v369 = vpack.c.bf16 %v331, %v328
    %v370 = vpack.c.bf16 %v339, %v336
    %v371 = vpack.c.bf16 %v347, %v344
    %v372 = vpack.c.bf16 %v355, %v352
    %v373 = vpack.c.bf16 %v363, %v360
    %v378 = vunpack.c.l.b16 %v118
    %v379 = vunpack.c.l.b16 %v119
    %v380 = vunpack.c.l.b16 %v120
    %v381 = vunpack.c.l.b16 %v121
    %v382 = vpack.c.b16 %v379, %v378
    %v383 = vpack.c.b16 %v381, %v380
    %386 = vmatprep.subr.bf16.mxu0 0
    %387 = vmatpush1.bf16.xpose.msra.mxu0 %v366
    %388 = vmatprep.subr.bf16.mxu0 0
    %389 = vmatpush1.bf16.xpose.msra.mxu0 0
    %390 = vmatprep.subr.bf16.mxu0 0
    %391 = vmatpush1.bf16.xpose.msra.mxu0 0
    %392 = vmatprep.subr.bf16.mxu0 0
    %393 = vmatpush1.bf16.xpose.msra.mxu0 0
    %394 = vmatprep.subr.bf16.mxu0 0
    %395 = vmatpush1.bf16.xpose.msra.mxu0 0
    %396 = vmatprep.subr.bf16.mxu0 0
    %397 = vmatpush1.bf16.xpose.msra.mxu0 0
    %398 = vmatprep.subr.bf16.mxu0 0
    %399 = vmatpush1.bf16.xpose.msra.mxu0 0
    %400 = vmatprep.subr.bf16.mxu0 0
    %401 = vmatpush1.bf16.xpose.msra.mxu0 0
    %402 = vmatprep.subr.bf16.mxu0 0
    %403 = vmatpush1.bf16.xpose.msra.mxu0 0
    %404 = vmatprep.subr.bf16.mxu0 0
    %405 = vmatpush1.bf16.xpose.msra.mxu0 0
    %406 = vmatprep.subr.bf16.mxu0 0
    %407 = vmatpush1.bf16.xpose.msra.mxu0 0
    %408 = vmatprep.subr.bf16.mxu0 0
    %409 = vmatpush1.bf16.xpose.msra.mxu0 0
    %410 = vmatprep.subr.bf16.mxu0 0
    %411 = vmatpush1.bf16.xpose.msra.mxu0 0
    %412 = vmatprep.subr.bf16.mxu0 0
    %413 = vmatpush1.bf16.xpose.msra.mxu0 0
    %414 = vmatprep.subr.bf16.mxu0 0
    %415 = vmatpush1.bf16.xpose.msra.mxu0 0
    %416 = vmatprep.subr.bf16.mxu0 0
    %417 = vmatpush1.bf16.xpose.msra.mxu0 0
    %418 = vmatprep.mubr.bf16.mxu0 0
    %419 = vmatmul.mubr.bf16.gmra.mrb[0].mxu0 %v382
    %v420 = vpop.f32.mrb[0].mxu0
    %v421 = vadd.f32 0.0, %v420
    %v422 = vpop.f32.mrb[0].mxu0
    %v423 = vpop.f32.mrb[0].mxu0
    %v424 = vadd.f32 0.0, %v423
    %v425 = vpop.f32.mrb[0].mxu0
    %426 = vmatprep.mubr.bf16.mxu0 0
    %427 = vmatmul.mubr.bf16.gmra.mrb[0].mxu0 %v383
    %v428 = vpop.f32.mrb[0].mxu0
    %v429 = vadd.f32 0.0, %v428
    %v430 = vpop.f32.mrb[0].mxu0
    %v431 = vpop.f32.mrb[0].mxu0
    %v432 = vadd.f32 0.0, %v431
    %v433 = vpop.f32.mrb[0].mxu0
    %434 = vdwg.mxu0
    %v439 = vunpack.c.l.b16 %v122
    %v440 = vunpack.c.l.b16 %v123
    %v441 = vunpack.c.l.b16 %v124
    %v442 = vunpack.c.l.b16 %v125
    %v443 = vpack.c.b16 %v440, %v439
    %v444 = vpack.c.b16 %v442, %v441
    %447 = vmatprep.subr.bf16.mxu0 0
    %448 = vmatpush1.bf16.xpose.msra.mxu0 %v367
    %449 = vmatprep.subr.bf16.mxu0 0
    %450 = vmatpush1.bf16.xpose.msra.mxu0 0
    %451 = vmatprep.subr.bf16.mxu0 0
    %452 = vmatpush1.bf16.xpose.msra.mxu0 0
    %453 = vmatprep.subr.bf16.mxu0 0
    %454 = vmatpush1.bf16.xpose.msra.mxu0 0
    %455 = vmatprep.subr.bf16.mxu0 0
    %456 = vmatpush1.bf16.xpose.msra.mxu0 0
    %457 = vmatprep.subr.bf16.mxu0 0
    %458 = vmatpush1.bf16.xpose.msra.mxu0 0
    %459 = vmatprep.subr.bf16.mxu0 0
    %460 = vmatpush1.bf16.xpose.msra.mxu0 0
    %461 = vmatprep.subr.bf16.mxu0 0
    %462 = vmatpush1.bf16.xpose.msra.mxu0 0
    %463 = vmatprep.subr.bf16.mxu0 0
    %464 = vmatpush1.bf16.xpose.msra.mxu0 0
    %465 = vmatprep.subr.bf16.mxu0 0
    %466 = vmatpush1.bf16.xpose.msra.mxu0 0
    %467 = vmatprep.subr.bf16.mxu0 0
    %468 = vmatpush1.bf16.xpose.msra.mxu0 0
    %469 = vmatprep.subr.bf16.mxu0 0
    %470 = vmatpush1.bf16.xpose.msra.mxu0 0
    %471 = vmatprep.subr.bf16.mxu0 0
    %472 = vmatpush1.bf16.xpose.msra.mxu0 0
    %473 = vmatprep.subr.bf16.mxu0 0
    %474 = vmatpush1.bf16.xpose.msra.mxu0 0
    %475 = vmatprep.subr.bf16.mxu0 0
    %476 = vmatpush1.bf16.xpose.msra.mxu0 0
    %477 = vmatprep.subr.bf16.mxu0 0
    %478 = vmatpush1.bf16.xpose.msra.mxu0 0
    %479 = vmatprep.mubr.bf16.mxu0 0
    %480 = vmatmul.mubr.bf16.gmra.mrb[0].mxu0 %v443
    %v481 = vpop.f32.mrb[0].mxu0
    %v482 = vadd.f32 0.0, %v481
    %v483 = vpop.f32.mrb[0].mxu0
    %v484 = vpop.f32.mrb[0].mxu0
    %v485 = vadd.f32 0.0, %v484
    %v486 = vpop.f32.mrb[0].mxu0
    %487 = vmatprep.mubr.bf16.mxu0 0
    %488 = vmatmul.mubr.bf16.gmra.mrb[0].mxu0 %v444
    %v489 = vpop.f32.mrb[0].mxu0
    %v490 = vadd.f32 0.0, %v489
    %v491 = vpop.f32.mrb[0].mxu0
    %v492 = vpop.f32.mrb[0].mxu0
    %v493 = vadd.f32 0.0, %v492
    %v494 = vpop.f32.mrb[0].mxu0
    %495 = vdwg.mxu0
    %v500 = vunpack.c.l.b16 %v126
    %v501 = vunpack.c.l.b16 %v127
    %v502 = vunpack.c.l.b16 %v128
    %v503 = vunpack.c.l.b16 %v129
    %v504 = vpack.c.b16 %v501, %v500
    %v505 = vpack.c.b16 %v503, %v502
    %508 = vmatprep.subr.bf16.mxu0 0
    %509 = vmatpush1.bf16.xpose.msra.mxu0 %v368
    %510 = vmatprep.subr.bf16.mxu0 0
    %511 = vmatpush1.bf16.xpose.msra.mxu0 0
    %512 = vmatprep.subr.bf16.mxu0 0
    %513 = vmatpush1.bf16.xpose.msra.mxu0 0
    %514 = vmatprep.subr.bf16.mxu0 0
    %515 = vmatpush1.bf16.xpose.msra.mxu0 0
    %516 = vmatprep.subr.bf16.mxu0 0
    %517 = vmatpush1.bf16.xpose.msra.mxu0 0
    %518 = vmatprep.subr.bf16.mxu0 0
    %519 = vmatpush1.bf16.xpose.msra.mxu0 0
    %520 = vmatprep.subr.bf16.mxu0 0
    %521 = vmatpush1.bf16.xpose.msra.mxu0 0
    %522 = vmatprep.subr.bf16.mxu0 0
    %523 = vmatpush1.bf16.xpose.msra.mxu0 0
    %524 = vmatprep.subr.bf16.mxu0 0
    %525 = vmatpush1.bf16.xpose.msra.mxu0 0
    %526 = vmatprep.subr.bf16.mxu0 0
    %527 = vmatpush1.bf16.xpose.msra.mxu0 0
    %528 = vmatprep.subr.bf16.mxu0 0
    %529 = vmatpush1.bf16.xpose.msra.mxu0 0
    %530 = vmatprep.subr.bf16.mxu0 0
    %531 = vmatpush1.bf16.xpose.msra.mxu0 0
    %532 = vmatprep.subr.bf16.mxu0 0
    %533 = vmatpush1.bf16.xpose.msra.mxu0 0
    %534 = vmatprep.subr.bf16.mxu0 0
    %535 = vmatpush1.bf16.xpose.msra.mxu0 0
    %536 = vmatprep.subr.bf16.mxu0 0
    %537 = vmatpush1.bf16.xpose.msra.mxu0 0
    %538 = vmatprep.subr.bf16.mxu0 0
    %539 = vmatpush1.bf16.xpose.msra.mxu0 0
    %540 = vmatprep.mubr.bf16.mxu0 0
    %541 = vmatmul.mubr.bf16.gmra.mrb[0].mxu0 %v504
    %v542 = vpop.f32.mrb[0].mxu0
    %v543 = vadd.f32 0.0, %v542
    %v544 = vpop.f32.mrb[0].mxu0
    %v545 = vpop.f32.mrb[0].mxu0
    %v546 = vadd.f32 0.0, %v545
    %v547 = vpop.f32.mrb[0].mxu0
    %548 = vmatprep.mubr.bf16.mxu0 0
    %549 = vmatmul.mubr.bf16.gmra.mrb[0].mxu0 %v505
    %v550 = vpop.f32.mrb[0].mxu0
    %v551 = vadd.f32 0.0, %v550
    %v552 = vpop.f32.mrb[0].mxu0
    %v553 = vpop.f32.mrb[0].mxu0
    %v554 = vadd.f32 0.0, %v553
    %v555 = vpop.f32.mrb[0].mxu0
    %556 = vdwg.mxu0
    %v561 = vunpack.c.l.b16 %v130
    %v562 = vunpack.c.l.b16 %v131
    %v563 = vunpack.c.l.b16 %v132
    %v564 = vunpack.c.l.b16 %v133
    %v565 = vpack.c.b16 %v562, %v561
    %v566 = vpack.c.b16 %v564, %v563
    %569 = vmatprep.subr.bf16.mxu0 0
    %570 = vmatpush1.bf16.xpose.msra.mxu0 %v369
    %571 = vmatprep.subr.bf16.mxu0 0
    %572 = vmatpush1.bf16.xpose.msra.mxu0 0
    %573 = vmatprep.subr.bf16.mxu0 0
    %574 = vmatpush1.bf16.xpose.msra.mxu0 0
    %575 = vmatprep.subr.bf16.mxu0 0
    %576 = vmatpush1.bf16.xpose.msra.mxu0 0
    %577 = vmatprep.subr.bf16.mxu0 0
    %578 = vmatpush1.bf16.xpose.msra.mxu0 0
    %579 = vmatprep.subr.bf16.mxu0 0
    %580 = vmatpush1.bf16.xpose.msra.mxu0 0
    %581 = vmatprep.subr.bf16.mxu0 0
    %582 = vmatpush1.bf16.xpose.msra.mxu0 0
    %583 = vmatprep.subr.bf16.mxu0 0
    %584 = vmatpush1.bf16.xpose.msra.mxu0 0
    %585 = vmatprep.subr.bf16.mxu0 0
    %586 = vmatpush1.bf16.xpose.msra.mxu0 0
    %587 = vmatprep.subr.bf16.mxu0 0
    %588 = vmatpush1.bf16.xpose.msra.mxu0 0
    %589 = vmatprep.subr.bf16.mxu0 0
    %590 = vmatpush1.bf16.xpose.msra.mxu0 0
    %591 = vmatprep.subr.bf16.mxu0 0
    %592 = vmatpush1.bf16.xpose.msra.mxu0 0
    %593 = vmatprep.subr.bf16.mxu0 0
    %594 = vmatpush1.bf16.xpose.msra.mxu0 0
    %595 = vmatprep.subr.bf16.mxu0 0
    %596 = vmatpush1.bf16.xpose.msra.mxu0 0
    %597 = vmatprep.subr.bf16.mxu0 0
    %598 = vmatpush1.bf16.xpose.msra.mxu0 0
    %599 = vmatprep.subr.bf16.mxu0 0
    %600 = vmatpush1.bf16.xpose.msra.mxu0 0
    %601 = vmatprep.mubr.bf16.mxu0 0
    %602 = vmatmul.mubr.bf16.gmra.mrb[0].mxu0 %v565
    %v603 = vpop.f32.mrb[0].mxu0
    %v604 = vadd.f32 0.0, %v603
    %v605 = vpop.f32.mrb[0].mxu0
    %v606 = vpop.f32.mrb[0].mxu0
    %v607 = vadd.f32 0.0, %v606
    %v608 = vpop.f32.mrb[0].mxu0
    %609 = vmatprep.mubr.bf16.mxu0 0
    %610 = vmatmul.mubr.bf16.gmra.mrb[0].mxu0 %v566
    %v611 = vpop.f32.mrb[0].mxu0
    %v612 = vadd.f32 0.0, %v611
    %v613 = vpop.f32.mrb[0].mxu0
    %v614 = vpop.f32.mrb[0].mxu0
    %v615 = vadd.f32 0.0, %v614
    %v616 = vpop.f32.mrb[0].mxu0
    %617 = vdwg.mxu0
    %v622 = vunpack.c.l.b16 %v134
    %v623 = vunpack.c.l.b16 %v135
    %v624 = vunpack.c.l.b16 %v136
    %v625 = vunpack.c.l.b16 %v137
    %v626 = vpack.c.b16 %v623, %v622
    %v627 = vpack.c.b16 %v625, %v624
    %630 = vmatprep.subr.bf16.mxu0 0
    %631 = vmatpush1.bf16.xpose.msra.mxu0 %v370
    %632 = vmatprep.subr.bf16.mxu0 0
    %633 = vmatpush1.bf16.xpose.msra.mxu0 0
    %634 = vmatprep.subr.bf16.mxu0 0
    %635 = vmatpush1.bf16.xpose.msra.mxu0 0
    %636 = vmatprep.subr.bf16.mxu0 0
    %637 = vmatpush1.bf16.xpose.msra.mxu0 0
    %638 = vmatprep.subr.bf16.mxu0 0
    %639 = vmatpush1.bf16.xpose.msra.mxu0 0
    %640 = vmatprep.subr.bf16.mxu0 0
    %641 = vmatpush1.bf16.xpose.msra.mxu0 0
    %642 = vmatprep.subr.bf16.mxu0 0
    %643 = vmatpush1.bf16.xpose.msra.mxu0 0
    %644 = vmatprep.subr.bf16.mxu0 0
    %645 = vmatpush1.bf16.xpose.msra.mxu0 0
    %646 = vmatprep.subr.bf16.mxu0 0
    %647 = vmatpush1.bf16.xpose.msra.mxu0 0
    %648 = vmatprep.subr.bf16.mxu0 0
    %649 = vmatpush1.bf16.xpose.msra.mxu0 0
    %650 = vmatprep.subr.bf16.mxu0 0
    %651 = vmatpush1.bf16.xpose.msra.mxu0 0
    %652 = vmatprep.subr.bf16.mxu0 0
    %653 = vmatpush1.bf16.xpose.msra.mxu0 0
    %654 = vmatprep.subr.bf16.mxu0 0
    %655 = vmatpush1.bf16.xpose.msra.mxu0 0
    %656 = vmatprep.subr.bf16.mxu0 0
    %657 = vmatpush1.bf16.xpose.msra.mxu0 0
    %658 = vmatprep.subr.bf16.mxu0 0
    %659 = vmatpush1.bf16.xpose.msra.mxu0 0
    %660 = vmatprep.subr.bf16.mxu0 0
    %661 = vmatpush1.bf16.xpose.msra.mxu0 0
    %662 = vmatprep.mubr.bf16.mxu0 0
    %663 = vmatmul.mubr.bf16.gmra.mrb[0].mxu0 %v626
    %v664 = vpop.f32.mrb[0].mxu0
    %v665 = vadd.f32 0.0, %v664
    %v666 = vpop.f32.mrb[0].mxu0
    %v667 = vpop.f32.mrb[0].mxu0
    %v668 = vadd.f32 0.0, %v667
    %v669 = vpop.f32.mrb[0].mxu0
    %670 = vmatprep.mubr.bf16.mxu0 0
    %671 = vmatmul.mubr.bf16.gmra.mrb[0].mxu0 %v627
    %v672 = vpop.f32.mrb[0].mxu0
    %v673 = vadd.f32 0.0, %v672
    %v674 = vpop.f32.mrb[0].mxu0
    %v675 = vpop.f32.mrb[0].mxu0
    %v676 = vadd.f32 0.0, %v675
    %v677 = vpop.f32.mrb[0].mxu0
    %678 = vdwg.mxu0
    %v683 = vunpack.c.l.b16 %v138
    %v684 = vunpack.c.l.b16 %v139
    %v685 = vunpack.c.l.b16 %v140
    %v686 = vunpack.c.l.b16 %v141
    %v687 = vpack.c.b16 %v684, %v683
    %v688 = vpack.c.b16 %v686, %v685
    %691 = vmatprep.subr.bf16.mxu0 0
    %692 = vmatpush1.bf16.xpose.msra.mxu0 %v371
    %693 = vmatprep.subr.bf16.mxu0 0
    %694 = vmatpush1.bf16.xpose.msra.mxu0 0
    %695 = vmatprep.subr.bf16.mxu0 0
    %696 = vmatpush1.bf16.xpose.msra.mxu0 0
    %697 = vmatprep.subr.bf16.mxu0 0
    %698 = vmatpush1.bf16.xpose.msra.mxu0 0
    %699 = vmatprep.subr.bf16.mxu0 0
    %700 = vmatpush1.bf16.xpose.msra.mxu0 0
    %701 = vmatprep.subr.bf16.mxu0 0
    %702 = vmatpush1.bf16.xpose.msra.mxu0 0
    %703 = vmatprep.subr.bf16.mxu0 0
    %704 = vmatpush1.bf16.xpose.msra.mxu0 0
    %705 = vmatprep.subr.bf16.mxu0 0
    %706 = vmatpush1.bf16.xpose.msra.mxu0 0
    %707 = vmatprep.subr.bf16.mxu0 0
    %708 = vmatpush1.bf16.xpose.msra.mxu0 0
    %709 = vmatprep.subr.bf16.mxu0 0
    %710 = vmatpush1.bf16.xpose.msra.mxu0 0
    %711 = vmatprep.subr.bf16.mxu0 0
    %712 = vmatpush1.bf16.xpose.msra.mxu0 0
    %713 = vmatprep.subr.bf16.mxu0 0
    %714 = vmatpush1.bf16.xpose.msra.mxu0 0
    %715 = vmatprep.subr.bf16.mxu0 0
    %716 = vmatpush1.bf16.xpose.msra.mxu0 0
    %717 = vmatprep.subr.bf16.mxu0 0
    %718 = vmatpush1.bf16.xpose.msra.mxu0 0
    %719 = vmatprep.subr.bf16.mxu0 0
    %720 = vmatpush1.bf16.xpose.msra.mxu0 0
    %721 = vmatprep.subr.bf16.mxu0 0
    %722 = vmatpush1.bf16.xpose.msra.mxu0 0
    %723 = vmatprep.mubr.bf16.mxu0 0
    %724 = vmatmul.mubr.bf16.gmra.mrb[0].mxu0 %v687
    %v725 = vpop.f32.mrb[0].mxu0
    %v726 = vadd.f32 0.0, %v725
    %v727 = vpop.f32.mrb[0].mxu0
    %v728 = vpop.f32.mrb[0].mxu0
    %v729 = vadd.f32 0.0, %v728
    %v730 = vpop.f32.mrb[0].mxu0
    %731 = vmatprep.mubr.bf16.mxu0 0
    %732 = vmatmul.mubr.bf16.gmra.mrb[0].mxu0 %v688
    %v733 = vpop.f32.mrb[0].mxu0
    %v734 = vadd.f32 0.0, %v733
    %v735 = vpop.f32.mrb[0].mxu0
    %v736 = vpop.f32.mrb[0].mxu0
    %v737 = vadd.f32 0.0, %v736
    %v738 = vpop.f32.mrb[0].mxu0
    %739 = vdwg.mxu0
    %v744 = vunpack.c.l.b16 %v142
    %v745 = vunpack.c.l.b16 %v143
    %v746 = vunpack.c.l.b16 %v144
    %v747 = vunpack.c.l.b16 %v145
    %v748 = vpack.c.b16 %v745, %v744
    %v749 = vpack.c.b16 %v747, %v746
    %752 = vmatprep.subr.bf16.mxu0 0
    %753 = vmatpush1.bf16.xpose.msra.mxu0 %v372
    %754 = vmatprep.subr.bf16.mxu0 0
    %755 = vmatpush1.bf16.xpose.msra.mxu0 0
    %756 = vmatprep.subr.bf16.mxu0 0
    %757 = vmatpush1.bf16.xpose.msra.mxu0 0
    %758 = vmatprep.subr.bf16.mxu0 0
    %759 = vmatpush1.bf16.xpose.msra.mxu0 0
    %760 = vmatprep.subr.bf16.mxu0 0
    %761 = vmatpush1.bf16.xpose.msra.mxu0 0
    %762 = vmatprep.subr.bf16.mxu0 0
    %763 = vmatpush1.bf16.xpose.msra.mxu0 0
    %764 = vmatprep.subr.bf16.mxu0 0
    %765 = vmatpush1.bf16.xpose.msra.mxu0 0
    %766 = vmatprep.subr.bf16.mxu0 0
    %767 = vmatpush1.bf16.xpose.msra.mxu0 0
    %768 = vmatprep.subr.bf16.mxu0 0
    %769 = vmatpush1.bf16.xpose.msra.mxu0 0
    %770 = vmatprep.subr.bf16.mxu0 0
    %771 = vmatpush1.bf16.xpose.msra.mxu0 0
    %772 = vmatprep.subr.bf16.mxu0 0
    %773 = vmatpush1.bf16.xpose.msra.mxu0 0
    %774 = vmatprep.subr.bf16.mxu0 0
    %775 = vmatpush1.bf16.xpose.msra.mxu0 0
    %776 = vmatprep.subr.bf16.mxu0 0
    %777 = vmatpush1.bf16.xpose.msra.mxu0 0
    %778 = vmatprep.subr.bf16.mxu0 0
    %779 = vmatpush1.bf16.xpose.msra.mxu0 0
    %780 = vmatprep.subr.bf16.mxu0 0
    %781 = vmatpush1.bf16.xpose.msra.mxu0 0
    %782 = vmatprep.subr.bf16.mxu0 0
    %783 = vmatpush1.bf16.xpose.msra.mxu0 0
    %784 = vmatprep.mubr.bf16.mxu0 0
    %785 = vmatmul.mubr.bf16.gmra.mrb[0].mxu0 %v748
    %v786 = vpop.f32.mrb[0].mxu0
    %v787 = vadd.f32 0.0, %v786
    %v788 = vpop.f32.mrb[0].mxu0
    %v789 = vpop.f32.mrb[0].mxu0
    %v790 = vadd.f32 0.0, %v789
    %v791 = vpop.f32.mrb[0].mxu0
    %792 = vmatprep.mubr.bf16.mxu0 0
    %793 = vmatmul.mubr.bf16.gmra.mrb[0].mxu0 %v749
    %v794 = vpop.f32.mrb[0].mxu0
    %v795 = vadd.f32 0.0, %v794
    %v796 = vpop.f32.mrb[0].mxu0
    %v797 = vpop.f32.mrb[0].mxu0
    %v798 = vadd.f32 0.0, %v797
    %v799 = vpop.f32.mrb[0].mxu0
    %800 = vdwg.mxu0
    %v805 = vunpack.c.l.b16 %v146
    %v806 = vunpack.c.l.b16 %v147
    %v807 = vunpack.c.l.b16 %v148
    %v808 = vunpack.c.l.b16 %v149
    %v809 = vpack.c.b16 %v806, %v805
    %v810 = vpack.c.b16 %v808, %v807
    %813 = vmatprep.subr.bf16.mxu0 0
    %814 = vmatpush1.bf16.xpose.msra.mxu0 %v373
    %815 = vmatprep.subr.bf16.mxu0 0
    %816 = vmatpush1.bf16.xpose.msra.mxu0 0
    %817 = vmatprep.subr.bf16.mxu0 0
    %818 = vmatpush1.bf16.xpose.msra.mxu0 0
    %819 = vmatprep.subr.bf16.mxu0 0
    %820 = vmatpush1.bf16.xpose.msra.mxu0 0
    %821 = vmatprep.subr.bf16.mxu0 0
    %822 = vmatpush1.bf16.xpose.msra.mxu0 0
    %823 = vmatprep.subr.bf16.mxu0 0
    %824 = vmatpush1.bf16.xpose.msra.mxu0 0
    %825 = vmatprep.subr.bf16.mxu0 0
    %826 = vmatpush1.bf16.xpose.msra.mxu0 0
    %827 = vmatprep.subr.bf16.mxu0 0
    %828 = vmatpush1.bf16.xpose.msra.mxu0 0
    %829 = vmatprep.subr.bf16.mxu0 0
    %830 = vmatpush1.bf16.xpose.msra.mxu0 0
    %831 = vmatprep.subr.bf16.mxu0 0
    %832 = vmatpush1.bf16.xpose.msra.mxu0 0
    %833 = vmatprep.subr.bf16.mxu0 0
    %834 = vmatpush1.bf16.xpose.msra.mxu0 0
    %835 = vmatprep.subr.bf16.mxu0 0
    %836 = vmatpush1.bf16.xpose.msra.mxu0 0
    %837 = vmatprep.subr.bf16.mxu0 0
    %838 = vmatpush1.bf16.xpose.msra.mxu0 0
    %839 = vmatprep.subr.bf16.mxu0 0
    %840 = vmatpush1.bf16.xpose.msra.mxu0 0
    %841 = vmatprep.subr.bf16.mxu0 0
    %842 = vmatpush1.bf16.xpose.msra.mxu0 0
    %843 = vmatprep.subr.bf16.mxu0 0
    %844 = vmatpush1.bf16.xpose.msra.mxu0 0
    %845 = vmatprep.mubr.bf16.mxu0 0
    %846 = vmatmul.mubr.bf16.gmra.mrb[0].mxu0 %v809
    %v847 = vpop.f32.mrb[0].mxu0
    %v848 = vadd.f32 0.0, %v847
    %v849 = vpop.f32.mrb[0].mxu0
    %v850 = vpop.f32.mrb[0].mxu0
    %v851 = vadd.f32 0.0, %v850
    %v852 = vpop.f32.mrb[0].mxu0
    %853 = vmatprep.mubr.bf16.mxu0 0
    %854 = vmatmul.mubr.bf16.gmra.mrb[0].mxu0 %v810
    %v855 = vpop.f32.mrb[0].mxu0
    %v856 = vadd.f32 0.0, %v855
    %v857 = vpop.f32.mrb[0].mxu0
    %v858 = vpop.f32.mrb[0].mxu0
    %v859 = vadd.f32 0.0, %v858
    %v860 = vpop.f32.mrb[0].mxu0
    %861 = vdwg.mxu0
    %v862 = vld [vmem:[%s0] sm:$0xff]
    %v863 = vcombine.high %v862, %v862
    %v865 = vunpack.c.l.s4 1966171168
    %v866 = vunpack.c.0.s8 %v865
    %v867 = vlaneseq
    %v868 = vshrl.u32 %v867, 7
    %v869 = vsub.s32 %v866, %v868
    %v870 = vrot.slane %v862, %v869
    %v872 = vunpack.c.l.s4 1966171168
    %v873 = vunpack.c.0.s8 %v872
    %v874 = vlaneseq
    %v875 = vshrl.u32 %v874, 7
    %v876 = vsub.s32 %v873, %v875
    %v877 = vrot.slane %v863, %v876
    %v878 = vcombine.high %v870, %v870
    %v879 = vcombine.high %v877, %v877
    %v881 = vunpack.c.l.s4 1966171168
    %v882 = vunpack.c.0.s8 %v881
    %v883 = vlaneseq
    %v884 = vshrl.u32 %v883, 7
    %v885 = vsub.s32 %v882, %v884
    %v886 = vrot.slane %v870, %v885
    %v888 = vunpack.c.l.s4 1966171168
    %v889 = vunpack.c.0.s8 %v888
    %v890 = vlaneseq
    %v891 = vshrl.u32 %v890, 7
    %v892 = vsub.s32 %v889, %v891
    %v893 = vrot.slane %v877, %v892
    %v895 = vunpack.c.l.s4 1966171168
    %v896 = vunpack.c.0.s8 %v895
    %v897 = vlaneseq
    %v898 = vshrl.u32 %v897, 7
    %v899 = vsub.s32 %v896, %v898
    %v900 = vrot.slane %v878, %v899
    %v902 = vunpack.c.l.s4 1966171168
    %v903 = vunpack.c.0.s8 %v902
    %v904 = vlaneseq
    %v905 = vshrl.u32 %v904, 7
    %v906 = vsub.s32 %v903, %v905
    %v907 = vrot.slane %v879, %v906
    %v908 = vcombine.high %v886, %v886
    %v909 = vcombine.high %v893, %v893
    %v910 = vcombine.high %v900, %v900
    %v911 = vcombine.high %v907, %v907
    %v912 = vlaneseq
    %v913 = vand.u32 %v912, 127
    %v914 = vlaneseq
    %v915 = vshrl.u32 %v914, 7
    %v916 = vsub.s32 0, %v915
    %v917 = vrot.slane %v886, %v916
    %v918 = vlaneseq
    %v919 = vshrl.u32 %v918, 7
    %v920 = vsub.s32 0, %v919
    %v921 = vrot.slane %v900, %v920
    %v922 = vlaneseq
    %v923 = vshrl.u32 %v922, 7
    %v924 = vsub.s32 0, %v923
    %v925 = vrot.slane %v908, %v924
    %v926 = vlaneseq
    %v927 = vshrl.u32 %v926, 7
    %v928 = vsub.s32 0, %v927
    %v929 = vrot.slane %v910, %v928
    %v930 = vlaneseq
    %v931 = vshrl.u32 %v930, 7
    %v932 = vsub.s32 0, %v931
    %v933 = vrot.slane %v893, %v932
    %v934 = vlaneseq
    %v935 = vshrl.u32 %v934, 7
    %v936 = vsub.s32 0, %v935
    %v937 = vrot.slane %v907, %v936
    %v938 = vlaneseq
    %v939 = vshrl.u32 %v938, 7
    %v940 = vsub.s32 0, %v939
    %v941 = vrot.slane %v909, %v940
    %v942 = vlaneseq
    %v943 = vshrl.u32 %v942, 7
    %v944 = vsub.s32 0, %v943
    %v945 = vrot.slane %v911, %v944
    %946 = vset.pattern.permute.xlu0 0
    %947 = vperm.xlu0 %946, %v917
    %v948 = vpop.permute.xlu0 %947
    %949 = vset.pattern.permute.xlu0 0
    %950 = vperm.xlu0 %949, %v921
    %v951 = vpop.permute.xlu0 %950
    %952 = vset.pattern.permute.xlu0 0
    %953 = vperm.xlu0 %952, %v925
    %v954 = vpop.permute.xlu0 %953
    %955 = vset.pattern.permute.xlu0 0
    %956 = vperm.xlu0 %955, %v929
    %v957 = vpop.permute.xlu0 %956
    %958 = vset.pattern.permute.xlu0 0
    %959 = vperm.xlu0 %958, %v933
    %v960 = vpop.permute.xlu0 %959
    %961 = vset.pattern.permute.xlu0 0
    %962 = vperm.xlu0 %961, %v937
    %v963 = vpop.permute.xlu0 %962
    %964 = vset.pattern.permute.xlu0 0
    %965 = vperm.xlu0 %964, %v941
    %v966 = vpop.permute.xlu0 %965
    %967 = vset.pattern.permute.xlu0 0
    %968 = vperm.xlu0 %967, %v945
    %v969 = vpop.permute.xlu0 %968
    %vm970 = vcmp.lt.s32.totalorder %v913, %v948
    %vm971 = vcmp.lt.s32.totalorder %v913, %v951
    %vm972 = vcmp.lt.s32.totalorder %v913, %v954
    %vm973 = vcmp.lt.s32.totalorder %v913, %v957
    %vm974 = vcmp.lt.s32.totalorder %v913, %v960
    %vm975 = vcmp.lt.s32.totalorder %v913, %v963
    %vm976 = vcmp.lt.s32.totalorder %v913, %v966
    %vm977 = vcmp.lt.s32.totalorder %v913, %v969
    %v978 = vsel %vm970, %v421, -1e+10
    %v979 = vsel %vm970, %v424, -1e+10
    %v980 = vsel %vm970, %v429, -1e+10
    %v981 = vsel %vm970, %v432, -1e+10
    %v982 = vsel %vm971, %v482, -1e+10
    %v983 = vsel %vm971, %v485, -1e+10
    %v984 = vsel %vm971, %v490, -1e+10
    %v985 = vsel %vm971, %v493, -1e+10
    %v986 = vsel %vm972, %v543, -1e+10
    %v987 = vsel %vm972, %v546, -1e+10
    %v988 = vsel %vm972, %v551, -1e+10
    %v989 = vsel %vm972, %v554, -1e+10
    %v990 = vsel %vm973, %v604, -1e+10
    %v991 = vsel %vm973, %v607, -1e+10
    %v992 = vsel %vm973, %v612, -1e+10
    %v993 = vsel %vm973, %v615, -1e+10
    %v994 = vsel %vm974, %v665, -1e+10
    %v995 = vsel %vm974, %v668, -1e+10
    %v996 = vsel %vm974, %v673, -1e+10
    %v997 = vsel %vm974, %v676, -1e+10
    %v998 = vsel %vm975, %v726, -1e+10
    %v999 = vsel %vm975, %v729, -1e+10
    %v1000 = vsel %vm975, %v734, -1e+10
    %v1001 = vsel %vm975, %v737, -1e+10
    %v1002 = vsel %vm976, %v787, -1e+10
    %v1003 = vsel %vm976, %v790, -1e+10
    %v1004 = vsel %vm976, %v795, -1e+10
    %v1005 = vsel %vm976, %v798, -1e+10
    %v1006 = vsel %vm977, %v848, -1e+10
    %v1007 = vsel %vm977, %v851, -1e+10
    %v1008 = vsel %vm977, %v856, -1e+10
    %v1009 = vsel %vm977, %v859, -1e+10
    %vm1010 = vcmask 130048
    %v1011 = vsel %vm1010, %v978, -inf
    %1012 = vmax.xlane.f32.xlu0 %v1011
    %v1013 = vpop.xlane.xlu0 %1012
    %v1014 = vsel %vm1010, %v979, -inf
    %1015 = vmax.xlane.f32.xlu0 %v1014
    %v1016 = vpop.xlane.xlu0 %1015
    %v1017 = vsel %vm1010, %v980, -inf
    %1018 = vmax.xlane.f32.xlu0 %v1017
    %v1019 = vpop.xlane.xlu0 %1018
    %v1020 = vsel %vm1010, %v981, -inf
    %1021 = vmax.xlane.f32.xlu0 %v1020
    %v1022 = vpop.xlane.xlu0 %1021
    %v1023 = vsel %vm1010, %v982, -inf
    %1024 = vmax.xlane.f32.xlu0 %v1023
    %v1025 = vpop.xlane.xlu0 %1024
    %v1026 = vsel %vm1010, %v983, -inf
    %1027 = vmax.xlane.f32.xlu0 %v1026
    %v1028 = vpop.xlane.xlu0 %1027
    %v1029 = vsel %vm1010, %v984, -inf
    %1030 = vmax.xlane.f32.xlu0 %v1029
    %v1031 = vpop.xlane.xlu0 %1030
    %v1032 = vsel %vm1010, %v985, -inf
    %1033 = vmax.xlane.f32.xlu0 %v1032
    %v1034 = vpop.xlane.xlu0 %1033
    %v1035 = vsel %vm1010, %v986, -inf
    %1036 = vmax.xlane.f32.xlu0 %v1035
    %v1037 = vpop.xlane.xlu0 %1036
    %v1038 = vsel %vm1010, %v987, -inf
    %1039 = vmax.xlane.f32.xlu0 %v1038
    %v1040 = vpop.xlane.xlu0 %1039
    %v1041 = vsel %vm1010, %v988, -inf
    %1042 = vmax.xlane.f32.xlu0 %v1041
    %v1043 = vpop.xlane.xlu0 %1042
    %v1044 = vsel %vm1010, %v989, -inf
    %1045 = vmax.xlane.f32.xlu0 %v1044
    %v1046 = vpop.xlane.xlu0 %1045
    %v1047 = vsel %vm1010, %v990, -inf
    %1048 = vmax.xlane.f32.xlu0 %v1047
    %v1049 = vpop.xlane.xlu0 %1048
    %v1050 = vsel %vm1010, %v991, -inf
    %1051 = vmax.xlane.f32.xlu0 %v1050
    %v1052 = vpop.xlane.xlu0 %1051
    %v1053 = vsel %vm1010, %v992, -inf
    %1054 = vmax.xlane.f32.xlu0 %v1053
    %v1055 = vpop.xlane.xlu0 %1054
    %v1056 = vsel %vm1010, %v993, -inf
    %1057 = vmax.xlane.f32.xlu0 %v1056
    %v1058 = vpop.xlane.xlu0 %1057
    %v1059 = vsel %vm1010, %v994, -inf
    %1060 = vmax.xlane.f32.xlu0 %v1059
    %v1061 = vpop.xlane.xlu0 %1060
    %v1062 = vsel %vm1010, %v995, -inf
    %1063 = vmax.xlane.f32.xlu0 %v1062
    %v1064 = vpop.xlane.xlu0 %1063
    %v1065 = vsel %vm1010, %v996, -inf
    %1066 = vmax.xlane.f32.xlu0 %v1065
    %v1067 = vpop.xlane.xlu0 %1066
    %v1068 = vsel %vm1010, %v997, -inf
    %1069 = vmax.xlane.f32.xlu0 %v1068
    %v1070 = vpop.xlane.xlu0 %1069
    %v1071 = vsel %vm1010, %v998, -inf
    %1072 = vmax.xlane.f32.xlu0 %v1071
    %v1073 = vpop.xlane.xlu0 %1072
    %v1074 = vsel %vm1010, %v999, -inf
    %1075 = vmax.xlane.f32.xlu0 %v1074
    %v1076 = vpop.xlane.xlu0 %1075
    %v1077 = vsel %vm1010, %v1000, -inf
    %1078 = vmax.xlane.f32.xlu0 %v1077
    %v1079 = vpop.xlane.xlu0 %1078
    %v1080 = vsel %vm1010, %v1001, -inf
    %1081 = vmax.xlane.f32.xlu0 %v1080
    %v1082 = vpop.xlane.xlu0 %1081
    %v1083 = vsel %vm1010, %v1002, -inf
    %1084 = vmax.xlane.f32.xlu0 %v1083
    %v1085 = vpop.xlane.xlu0 %1084
    %v1086 = vsel %vm1010, %v1003, -inf
    %1087 = vmax.xlane.f32.xlu0 %v1086
    %v1088 = vpop.xlane.xlu0 %1087
    %v1089 = vsel %vm1010, %v1004, -inf
    %1090 = vmax.xlane.f32.xlu0 %v1089
    %v1091 = vpop.xlane.xlu0 %1090
    %v1092 = vsel %vm1010, %v1005, -inf
    %1093 = vmax.xlane.f32.xlu0 %v1092
    %v1094 = vpop.xlane.xlu0 %1093
    %v1095 = vsel %vm1010, %v1006, -inf
    %1096 = vmax.xlane.f32.xlu0 %v1095
    %v1097 = vpop.xlane.xlu0 %1096
    %v1098 = vsel %vm1010, %v1007, -inf
    %1099 = vmax.xlane.f32.xlu0 %v1098
    %v1100 = vpop.xlane.xlu0 %1099
    %v1101 = vsel %vm1010, %v1008, -inf
    %1102 = vmax.xlane.f32.xlu0 %v1101
    %v1103 = vpop.xlane.xlu0 %1102
    %v1104 = vsel %vm1010, %v1009, -inf
    %1105 = vmax.xlane.f32.xlu0 %v1104
    %v1106 = vpop.xlane.xlu0 %1105
    %v1107 = vsub.f32 %v978, %v1013
    %v1108 = vsub.f32 %v979, %v1016
    %v1109 = vsub.f32 %v980, %v1019
    %v1110 = vsub.f32 %v981, %v1022
    %v1111 = vsub.f32 %v982, %v1025
    %v1112 = vsub.f32 %v983, %v1028
    %v1113 = vsub.f32 %v984, %v1031
    %v1114 = vsub.f32 %v985, %v1034
    %v1115 = vsub.f32 %v986, %v1037
    %v1116 = vsub.f32 %v987, %v1040
    %v1117 = vsub.f32 %v988, %v1043
    %v1118 = vsub.f32 %v989, %v1046
    %v1119 = vsub.f32 %v990, %v1049
    %v1120 = vsub.f32 %v991, %v1052
    %v1121 = vsub.f32 %v992, %v1055
    %v1122 = vsub.f32 %v993, %v1058
    %v1123 = vsub.f32 %v994, %v1061
    %v1124 = vsub.f32 %v995, %v1064
    %v1125 = vsub.f32 %v996, %v1067
    %v1126 = vsub.f32 %v997, %v1070
    %v1127 = vsub.f32 %v998, %v1073
    %v1128 = vsub.f32 %v999, %v1076
    %v1129 = vsub.f32 %v1000, %v1079
    %v1130 = vsub.f32 %v1001, %v1082
    %v1131 = vsub.f32 %v1002, %v1085
    %v1132 = vsub.f32 %v1003, %v1088
    %v1133 = vsub.f32 %v1004, %v1091
    %v1134 = vsub.f32 %v1005, %v1094
    %v1135 = vsub.f32 %v1006, %v1097
    %v1136 = vsub.f32 %v1007, %v1100
    %v1137 = vsub.f32 %v1008, %v1103
    %v1138 = vsub.f32 %v1009, %v1106
    %v1139 = vmul.f32 %v1107, 1.442695
    %v1140 = vpow.pop %v1139
    %v1141 = vmul.f32 %v1108, 1.442695
    %v1142 = vpow.pop %v1141
    %v1143 = vmul.f32 %v1109, 1.442695
    %v1144 = vpow.pop %v1143
    %v1145 = vmul.f32 %v1110, 1.442695
    %v1146 = vpow.pop %v1145
    %v1147 = vmul.f32 %v1111, 1.442695
    %v1148 = vpow.pop %v1147
    %v1149 = vmul.f32 %v1112, 1.442695
    %v1150 = vpow.pop %v1149
    %v1151 = vmul.f32 %v1113, 1.442695
    %v1152 = vpow.pop %v1151
    %v1153 = vmul.f32 %v1114, 1.442695
    %v1154 = vpow.pop %v1153
    %v1155 = vmul.f32 %v1115, 1.442695
    %v1156 = vpow.pop %v1155
    %v1157 = vmul.f32 %v1116, 1.442695
    %v1158 = vpow.pop %v1157
    %v1159 = vmul.f32 %v1117, 1.442695
    %v1160 = vpow.pop %v1159
    %v1161 = vmul.f32 %v1118, 1.442695
    %v1162 = vpow.pop %v1161
    %v1163 = vmul.f32 %v1119, 1.442695
    %v1164 = vpow.pop %v1163
    %v1165 = vmul.f32 %v1120, 1.442695
    %v1166 = vpow.pop %v1165
    %v1167 = vmul.f32 %v1121, 1.442695
    %v1168 = vpow.pop %v1167
    %v1169 = vmul.f32 %v1122, 1.442695
    %v1170 = vpow.pop %v1169
    %v1171 = vmul.f32 %v1123, 1.442695
    %v1172 = vpow.pop %v1171
    %v1173 = vmul.f32 %v1124, 1.442695
    %v1174 = vpow.pop %v1173
    %v1175 = vmul.f32 %v1125, 1.442695
    %v1176 = vpow.pop %v1175
    %v1177 = vmul.f32 %v1126, 1.442695
    %v1178 = vpow.pop %v1177
    %v1179 = vmul.f32 %v1127, 1.442695
    %v1180 = vpow.pop %v1179
    %v1181 = vmul.f32 %v1128, 1.442695
    %v1182 = vpow.pop %v1181
    %v1183 = vmul.f32 %v1129, 1.442695
    %v1184 = vpow.pop %v1183
    %v1185 = vmul.f32 %v1130, 1.442695
    %v1186 = vpow.pop %v1185
    %v1187 = vmul.f32 %v1131, 1.442695
    %v1188 = vpow.pop %v1187
    %v1189 = vmul.f32 %v1132, 1.442695
    %v1190 = vpow.pop %v1189
    %v1191 = vmul.f32 %v1133, 1.442695
    %v1192 = vpow.pop %v1191
    %v1193 = vmul.f32 %v1134, 1.442695
    %v1194 = vpow.pop %v1193
    %v1195 = vmul.f32 %v1135, 1.442695
    %v1196 = vpow.pop %v1195
    %v1197 = vmul.f32 %v1136, 1.442695
    %v1198 = vpow.pop %v1197
    %v1199 = vmul.f32 %v1137, 1.442695
    %v1200 = vpow.pop %v1199
    %v1201 = vmul.f32 %v1138, 1.442695
    %v1202 = vpow.pop %v1201
    %v1203 = vsel %vm1010, %v1140, 0.0
    %1204 = vadd.xlane.f32.xlu0 %v1203
    %v1205 = vpop.xlane.xlu0 %1204
    %v1206 = vsel %vm1010, %v1142, 0.0
    %1207 = vadd.xlane.f32.xlu0 %v1206
    %v1208 = vpop.xlane.xlu0 %1207
    %v1209 = vsel %vm1010, %v1144, 0.0
    %1210 = vadd.xlane.f32.xlu0 %v1209
    %v1211 = vpop.xlane.xlu0 %1210
    %v1212 = vsel %vm1010, %v1146, 0.0
    %1213 = vadd.xlane.f32.xlu0 %v1212
    %v1214 = vpop.xlane.xlu0 %1213
    %v1215 = vsel %vm1010, %v1148, 0.0
    %1216 = vadd.xlane.f32.xlu0 %v1215
    %v1217 = vpop.xlane.xlu0 %1216
    %v1218 = vsel %vm1010, %v1150, 0.0
    %1219 = vadd.xlane.f32.xlu0 %v1218
    %v1220 = vpop.xlane.xlu0 %1219
    %v1221 = vsel %vm1010, %v1152, 0.0
    %1222 = vadd.xlane.f32.xlu0 %v1221
    %v1223 = vpop.xlane.xlu0 %1222
    %v1224 = vsel %vm1010, %v1154, 0.0
    %1225 = vadd.xlane.f32.xlu0 %v1224
    %v1226 = vpop.xlane.xlu0 %1225
    %v1227 = vsel %vm1010, %v1156, 0.0
    %1228 = vadd.xlane.f32.xlu0 %v1227
    %v1229 = vpop.xlane.xlu0 %1228
    %v1230 = vsel %vm1010, %v1158, 0.0
    %1231 = vadd.xlane.f32.xlu0 %v1230
    %v1232 = vpop.xlane.xlu0 %1231
    %v1233 = vsel %vm1010, %v1160, 0.0
    %1234 = vadd.xlane.f32.xlu0 %v1233
    %v1235 = vpop.xlane.xlu0 %1234
    %v1236 = vsel %vm1010, %v1162, 0.0
    %1237 = vadd.xlane.f32.xlu0 %v1236
    %v1238 = vpop.xlane.xlu0 %1237
    %v1239 = vsel %vm1010, %v1164, 0.0
    %1240 = vadd.xlane.f32.xlu0 %v1239
    %v1241 = vpop.xlane.xlu0 %1240
    %v1242 = vsel %vm1010, %v1166, 0.0
    %1243 = vadd.xlane.f32.xlu0 %v1242
    %v1244 = vpop.xlane.xlu0 %1243
    %v1245 = vsel %vm1010, %v1168, 0.0
    %1246 = vadd.xlane.f32.xlu0 %v1245
    %v1247 = vpop.xlane.xlu0 %1246
    %v1248 = vsel %vm1010, %v1170, 0.0
    %1249 = vadd.xlane.f32.xlu0 %v1248
    %v1250 = vpop.xlane.xlu0 %1249
    %v1251 = vsel %vm1010, %v1172, 0.0
    %1252 = vadd.xlane.f32.xlu0 %v1251
    %v1253 = vpop.xlane.xlu0 %1252
    %v1254 = vsel %vm1010, %v1174, 0.0
    %1255 = vadd.xlane.f32.xlu0 %v1254
    %v1256 = vpop.xlane.xlu0 %1255
    %v1257 = vsel %vm1010, %v1176, 0.0
    %1258 = vadd.xlane.f32.xlu0 %v1257
    %v1259 = vpop.xlane.xlu0 %1258
    %v1260 = vsel %vm1010, %v1178, 0.0
    %1261 = vadd.xlane.f32.xlu0 %v1260
    %v1262 = vpop.xlane.xlu0 %1261
    %v1263 = vsel %vm1010, %v1180, 0.0
    %1264 = vadd.xlane.f32.xlu0 %v1263
    %v1265 = vpop.xlane.xlu0 %1264
    %v1266 = vsel %vm1010, %v1182, 0.0
    %1267 = vadd.xlane.f32.xlu0 %v1266
    %v1268 = vpop.xlane.xlu0 %1267
    %v1269 = vsel %vm1010, %v1184, 0.0
    %1270 = vadd.xlane.f32.xlu0 %v1269
    %v1271 = vpop.xlane.xlu0 %1270
    %v1272 = vsel %vm1010, %v1186, 0.0
    %1273 = vadd.xlane.f32.xlu0 %v1272
    %v1274 = vpop.xlane.xlu0 %1273
    %v1275 = vsel %vm1010, %v1188, 0.0
    %1276 = vadd.xlane.f32.xlu0 %v1275
    %v1277 = vpop.xlane.xlu0 %1276
    %v1278 = vsel %vm1010, %v1190, 0.0
    %1279 = vadd.xlane.f32.xlu0 %v1278
    %v1280 = vpop.xlane.xlu0 %1279
    %v1281 = vsel %vm1010, %v1192, 0.0
    %1282 = vadd.xlane.f32.xlu0 %v1281
    %v1283 = vpop.xlane.xlu0 %1282
    %v1284 = vsel %vm1010, %v1194, 0.0
    %1285 = vadd.xlane.f32.xlu0 %v1284
    %v1286 = vpop.xlane.xlu0 %1285
    %v1287 = vsel %vm1010, %v1196, 0.0
    %1288 = vadd.xlane.f32.xlu0 %v1287
    %v1289 = vpop.xlane.xlu0 %1288
    %v1290 = vsel %vm1010, %v1198, 0.0
    %1291 = vadd.xlane.f32.xlu0 %v1290
    %v1292 = vpop.xlane.xlu0 %1291
    %v1293 = vsel %vm1010, %v1200, 0.0
    %1294 = vadd.xlane.f32.xlu0 %v1293
    %v1295 = vpop.xlane.xlu0 %1294
    %v1296 = vsel %vm1010, %v1202, 0.0
    %1297 = vadd.xlane.f32.xlu0 %v1296
    %v1298 = vpop.xlane.xlu0 %1297
    %v1299 = vrcp.pop %v1205
    %v1300 = vrcp.pop %v1208
    %v1301 = vrcp.pop %v1211
    %v1302 = vrcp.pop %v1214
    %v1303 = vrcp.pop %v1217
    %v1304 = vrcp.pop %v1220
    %v1305 = vrcp.pop %v1223
    %v1306 = vrcp.pop %v1226
    %v1307 = vrcp.pop %v1229
    %v1308 = vrcp.pop %v1232
    %v1309 = vrcp.pop %v1235
    %v1310 = vrcp.pop %v1238
    %v1311 = vrcp.pop %v1241
    %v1312 = vrcp.pop %v1244
    %v1313 = vrcp.pop %v1247
    %v1314 = vrcp.pop %v1250
    %v1315 = vrcp.pop %v1253
    %v1316 = vrcp.pop %v1256
    %v1317 = vrcp.pop %v1259
    %v1318 = vrcp.pop %v1262
    %v1319 = vrcp.pop %v1265
    %v1320 = vrcp.pop %v1268
    %v1321 = vrcp.pop %v1271
    %v1322 = vrcp.pop %v1274
    %v1323 = vrcp.pop %v1277
    %v1324 = vrcp.pop %v1280
    %v1325 = vrcp.pop %v1283
    %v1326 = vrcp.pop %v1286
    %v1327 = vrcp.pop %v1289
    %v1328 = vrcp.pop %v1292
    %v1329 = vrcp.pop %v1295
    %v1330 = vrcp.pop %v1298
    %v1331 = vmul.f32 %v1140, %v1299
    %v1332 = vmul.f32 %v1142, %v1300
    %v1333 = vmul.f32 %v1144, %v1301
    %v1334 = vmul.f32 %v1146, %v1302
    %v1335 = vmul.f32 %v1148, %v1303
    %v1336 = vmul.f32 %v1150, %v1304
    %v1337 = vmul.f32 %v1152, %v1305
    %v1338 = vmul.f32 %v1154, %v1306
    %v1339 = vmul.f32 %v1156, %v1307
    %v1340 = vmul.f32 %v1158, %v1308
    %v1341 = vmul.f32 %v1160, %v1309
    %v1342 = vmul.f32 %v1162, %v1310
    %v1343 = vmul.f32 %v1164, %v1311
    %v1344 = vmul.f32 %v1166, %v1312
    %v1345 = vmul.f32 %v1168, %v1313
    %v1346 = vmul.f32 %v1170, %v1314
    %v1347 = vmul.f32 %v1172, %v1315
    %v1348 = vmul.f32 %v1174, %v1316
    %v1349 = vmul.f32 %v1176, %v1317
    %v1350 = vmul.f32 %v1178, %v1318
    %v1351 = vmul.f32 %v1180, %v1319
    %v1352 = vmul.f32 %v1182, %v1320
    %v1353 = vmul.f32 %v1184, %v1321
    %v1354 = vmul.f32 %v1186, %v1322
    %v1355 = vmul.f32 %v1188, %v1323
    %v1356 = vmul.f32 %v1190, %v1324
    %v1357 = vmul.f32 %v1192, %v1325
    %v1358 = vmul.f32 %v1194, %v1326
    %v1359 = vmul.f32 %v1196, %v1327
    %v1360 = vmul.f32 %v1198, %v1328
    %v1361 = vmul.f32 %v1200, %v1329
    %v1362 = vmul.f32 %v1202, %v1330
    %v1363 = vpack.c.bf16 %v1332, %v1331
    %v1364 = vpack.c.bf16 %v1334, %v1333
    %v1365 = vpack.c.bf16 %v1336, %v1335
    %v1366 = vpack.c.bf16 %v1338, %v1337
    %v1367 = vpack.c.bf16 %v1340, %v1339
    %v1368 = vpack.c.bf16 %v1342, %v1341
    %v1369 = vpack.c.bf16 %v1344, %v1343
    %v1370 = vpack.c.bf16 %v1346, %v1345
    %v1371 = vpack.c.bf16 %v1348, %v1347
    %v1372 = vpack.c.bf16 %v1350, %v1349
    %v1373 = vpack.c.bf16 %v1352, %v1351
    %v1374 = vpack.c.bf16 %v1354, %v1353
    %v1375 = vpack.c.bf16 %v1356, %v1355
    %v1376 = vpack.c.bf16 %v1358, %v1357
    %v1377 = vpack.c.bf16 %v1360, %v1359
    %v1378 = vpack.c.bf16 %v1362, %v1361
    %v1380 = vsel %vm1010, %v1363, 0
    %v1383 = vsel %vm1010, %v1364, 0
    %1385 = vmatprep.subr.bf16.mxu0 0
    %1386 = vmatpush1.bf16.msra.mxu0 %v205
    %1387 = vmatprep.subr.bf16.mxu0 0
    %1388 = vmatpush1.bf16.msra.mxu0 0
    %1389 = vmatprep.subr.bf16.mxu0 0
    %1390 = vmatpush1.bf16.msra.mxu0 0
    %1391 = vmatprep.subr.bf16.mxu0 0
    %1392 = vmatpush1.bf16.msra.mxu0 0
    %1393 = vmatprep.subr.bf16.mxu0 0
    %1394 = vmatpush1.bf16.msra.mxu0 0
    %1395 = vmatprep.subr.bf16.mxu0 0
    %1396 = vmatpush1.bf16.msra.mxu0 0
    %1397 = vmatprep.subr.bf16.mxu0 0
    %1398 = vmatpush1.bf16.msra.mxu0 0
    %1399 = vmatprep.subr.bf16.mxu0 0
    %1400 = vmatpush1.bf16.msra.mxu0 0
    %1401 = vmatprep.subr.bf16.mxu0 0
    %1402 = vmatpush1.bf16.msra.mxu0 0
    %1403 = vmatprep.subr.bf16.mxu0 0
    %1404 = vmatpush1.bf16.msra.mxu0 0
    %1405 = vmatprep.subr.bf16.mxu0 0
    %1406 = vmatpush1.bf16.msra.mxu0 0
    %1407 = vmatprep.subr.bf16.mxu0 0
    %1408 = vmatpush1.bf16.msra.mxu0 0
    %1409 = vmatprep.subr.bf16.mxu0 0
    %1410 = vmatpush1.bf16.msra.mxu0 0
    %1411 = vmatprep.subr.bf16.mxu0 0
    %1412 = vmatpush1.bf16.msra.mxu0 0
    %1413 = vmatprep.subr.bf16.mxu0 0
    %1414 = vmatpush1.bf16.msra.mxu0 0
    %1415 = vmatprep.subr.bf16.mxu0 0
    %1416 = vmatpush1.bf16.msra.mxu0 0
    %1417 = vmatprep.mubr.bf16.mxu0 0
    %1418 = vmatmul.mubr.bf16.gmra.mrb[0].mxu0 %v1380
    %v1419 = vpop.f32.mrb[0].mxu0
    %v1420 = vadd.f32 0.0, %v1419
    %v1421 = vpop.f32.mrb[0].mxu0
    %v1422 = vpop.f32.mrb[0].mxu0
    %v1423 = vadd.f32 0.0, %v1422
    %v1424 = vpop.f32.mrb[0].mxu0
    %1425 = vmatprep.mubr.bf16.mxu0 0
    %1426 = vmatmul.mubr.bf16.gmra.mrb[0].mxu0 %v1383
    %v1427 = vpop.f32.mrb[0].mxu0
    %v1428 = vadd.f32 0.0, %v1427
    %v1429 = vpop.f32.mrb[0].mxu0
    %v1430 = vpop.f32.mrb[0].mxu0
    %v1431 = vadd.f32 0.0, %v1430
    %v1432 = vpop.f32.mrb[0].mxu0
    %1433 = vdwg.mxu0
    %v1435 = vsel %vm1010, %v1365, 0
    %v1438 = vsel %vm1010, %v1366, 0
    %1440 = vmatprep.subr.bf16.mxu0 0
    %1441 = vmatpush1.bf16.msra.mxu0 %v206
    %1442 = vmatprep.subr.bf16.mxu0 0
    %1443 = vmatpush1.bf16.msra.mxu0 0
    %1444 = vmatprep.subr.bf16.mxu0 0
    %1445 = vmatpush1.bf16.msra.mxu0 0
    %1446 = vmatprep.subr.bf16.mxu0 0
    %1447 = vmatpush1.bf16.msra.mxu0 0
    %1448 = vmatprep.subr.bf16.mxu0 0
    %1449 = vmatpush1.bf16.msra.mxu0 0
    %1450 = vmatprep.subr.bf16.mxu0 0
    %1451 = vmatpush1.bf16.msra.mxu0 0
    %1452 = vmatprep.subr.bf16.mxu0 0
    %1453 = vmatpush1.bf16.msra.mxu0 0
    %1454 = vmatprep.subr.bf16.mxu0 0
    %1455 = vmatpush1.bf16.msra.mxu0 0
    %1456 = vmatprep.subr.bf16.mxu0 0
    %1457 = vmatpush1.bf16.msra.mxu0 0
    %1458 = vmatprep.subr.bf16.mxu0 0
    %1459 = vmatpush1.bf16.msra.mxu0 0
    %1460 = vmatprep.subr.bf16.mxu0 0
    %1461 = vmatpush1.bf16.msra.mxu0 0
    %1462 = vmatprep.subr.bf16.mxu0 0
    %1463 = vmatpush1.bf16.msra.mxu0 0
    %1464 = vmatprep.subr.bf16.mxu0 0
    %1465 = vmatpush1.bf16.msra.mxu0 0
    %1466 = vmatprep.subr.bf16.mxu0 0
    %1467 = vmatpush1.bf16.msra.mxu0 0
    %1468 = vmatprep.subr.bf16.mxu0 0
    %1469 = vmatpush1.bf16.msra.mxu0 0
    %1470 = vmatprep.subr.bf16.mxu0 0
    %1471 = vmatpush1.bf16.msra.mxu0 0
    %1472 = vmatprep.mubr.bf16.mxu0 0
    %1473 = vmatmul.mubr.bf16.gmra.mrb[0].mxu0 %v1435
    %v1474 = vpop.f32.mrb[0].mxu0
    %v1475 = vadd.f32 0.0, %v1474
    %v1476 = vpop.f32.mrb[0].mxu0
    %v1477 = vpop.f32.mrb[0].mxu0
    %v1478 = vadd.f32 0.0, %v1477
    %v1479 = vpop.f32.mrb[0].mxu0
    %1480 = vmatprep.mubr.bf16.mxu0 0
    %1481 = vmatmul.mubr.bf16.gmra.mrb[0].mxu0 %v1438
    %v1482 = vpop.f32.mrb[0].mxu0
    %v1483 = vadd.f32 0.0, %v1482
    %v1484 = vpop.f32.mrb[0].mxu0
    %v1485 = vpop.f32.mrb[0].mxu0
    %v1486 = vadd.f32 0.0, %v1485
    %v1487 = vpop.f32.mrb[0].mxu0
    %1488 = vdwg.mxu0
    %v1490 = vsel %vm1010, %v1367, 0
    %v1493 = vsel %vm1010, %v1368, 0
    %1495 = vmatprep.subr.bf16.mxu0 0
    %1496 = vmatpush1.bf16.msra.mxu0 %v207
    %1497 = vmatprep.subr.bf16.mxu0 0
    %1498 = vmatpush1.bf16.msra.mxu0 0
    %1499 = vmatprep.subr.bf16.mxu0 0
    %1500 = vmatpush1.bf16.msra.mxu0 0
    %1501 = vmatprep.subr.bf16.mxu0 0
    %1502 = vmatpush1.bf16.msra.mxu0 0
    %1503 = vmatprep.subr.bf16.mxu0 0
    %1504 = vmatpush1.bf16.msra.mxu0 0
    %1505 = vmatprep.subr.bf16.mxu0 0
    %1506 = vmatpush1.bf16.msra.mxu0 0
    %1507 = vmatprep.subr.bf16.mxu0 0
    %1508 = vmatpush1.bf16.msra.mxu0 0
    %1509 = vmatprep.subr.bf16.mxu0 0
    %1510 = vmatpush1.bf16.msra.mxu0 0
    %1511 = vmatprep.subr.bf16.mxu0 0
    %1512 = vmatpush1.bf16.msra.mxu0 0
    %1513 = vmatprep.subr.bf16.mxu0 0
    %1514 = vmatpush1.bf16.msra.mxu0 0
    %1515 = vmatprep.subr.bf16.mxu0 0
    %1516 = vmatpush1.bf16.msra.mxu0 0
    %1517 = vmatprep.subr.bf16.mxu0 0
    %1518 = vmatpush1.bf16.msra.mxu0 0
    %1519 = vmatprep.subr.bf16.mxu0 0
    %1520 = vmatpush1.bf16.msra.mxu0 0
    %1521 = vmatprep.subr.bf16.mxu0 0
    %1522 = vmatpush1.bf16.msra.mxu0 0
    %1523 = vmatprep.subr.bf16.mxu0 0
    %1524 = vmatpush1.bf16.msra.mxu0 0
    %1525 = vmatprep.subr.bf16.mxu0 0
    %1526 = vmatpush1.bf16.msra.mxu0 0
    %1527 = vmatprep.mubr.bf16.mxu0 0
    %1528 = vmatmul.mubr.bf16.gmra.mrb[0].mxu0 %v1490
    %v1529 = vpop.f32.mrb[0].mxu0
    %v1530 = vadd.f32 0.0, %v1529
    %v1531 = vpop.f32.mrb[0].mxu0
    %v1532 = vpop.f32.mrb[0].mxu0
    %v1533 = vadd.f32 0.0, %v1532
    %v1534 = vpop.f32.mrb[0].mxu0
    %1535 = vmatprep.mubr.bf16.mxu0 0
    %1536 = vmatmul.mubr.bf16.gmra.mrb[0].mxu0 %v1493
    %v1537 = vpop.f32.mrb[0].mxu0
    %v1538 = vadd.f32 0.0, %v1537
    %v1539 = vpop.f32.mrb[0].mxu0
    %v1540 = vpop.f32.mrb[0].mxu0
    %v1541 = vadd.f32 0.0, %v1540
    %v1542 = vpop.f32.mrb[0].mxu0
    %1543 = vdwg.mxu0
    %v1545 = vsel %vm1010, %v1369, 0
    %v1548 = vsel %vm1010, %v1370, 0
    %1550 = vmatprep.subr.bf16.mxu0 0
    %1551 = vmatpush1.bf16.msra.mxu0 %v208
    %1552 = vmatprep.subr.bf16.mxu0 0
    %1553 = vmatpush1.bf16.msra.mxu0 0
    %1554 = vmatprep.subr.bf16.mxu0 0
    %1555 = vmatpush1.bf16.msra.mxu0 0
    %1556 = vmatprep.subr.bf16.mxu0 0
    %1557 = vmatpush1.bf16.msra.mxu0 0
    %1558 = vmatprep.subr.bf16.mxu0 0
    %1559 = vmatpush1.bf16.msra.mxu0 0
    %1560 = vmatprep.subr.bf16.mxu0 0
    %1561 = vmatpush1.bf16.msra.mxu0 0
    %1562 = vmatprep.subr.bf16.mxu0 0
    %1563 = vmatpush1.bf16.msra.mxu0 0
    %1564 = vmatprep.subr.bf16.mxu0 0
    %1565 = vmatpush1.bf16.msra.mxu0 0
    %1566 = vmatprep.subr.bf16.mxu0 0
    %1567 = vmatpush1.bf16.msra.mxu0 0
    %1568 = vmatprep.subr.bf16.mxu0 0
    %1569 = vmatpush1.bf16.msra.mxu0 0
    %1570 = vmatprep.subr.bf16.mxu0 0
    %1571 = vmatpush1.bf16.msra.mxu0 0
    %1572 = vmatprep.subr.bf16.mxu0 0
    %1573 = vmatpush1.bf16.msra.mxu0 0
    %1574 = vmatprep.subr.bf16.mxu0 0
    %1575 = vmatpush1.bf16.msra.mxu0 0
    %1576 = vmatprep.subr.bf16.mxu0 0
    %1577 = vmatpush1.bf16.msra.mxu0 0
    %1578 = vmatprep.subr.bf16.mxu0 0
    %1579 = vmatpush1.bf16.msra.mxu0 0
    %1580 = vmatprep.subr.bf16.mxu0 0
    %1581 = vmatpush1.bf16.msra.mxu0 0
    %1582 = vmatprep.mubr.bf16.mxu0 0
    %1583 = vmatmul.mubr.bf16.gmra.mrb[0].mxu0 %v1545
    %v1584 = vpop.f32.mrb[0].mxu0
    %v1585 = vadd.f32 0.0, %v1584
    %v1586 = vpop.f32.mrb[0].mxu0
    %v1587 = vpop.f32.mrb[0].mxu0
    %v1588 = vadd.f32 0.0, %v1587
    %v1589 = vpop.f32.mrb[0].mxu0
    %1590 = vmatprep.mubr.bf16.mxu0 0
    %1591 = vmatmul.mubr.bf16.gmra.mrb[0].mxu0 %v1548
    %v1592 = vpop.f32.mrb[0].mxu0
    %v1593 = vadd.f32 0.0, %v1592
    %v1594 = vpop.f32.mrb[0].mxu0
    %v1595 = vpop.f32.mrb[0].mxu0
    %v1596 = vadd.f32 0.0, %v1595
    %v1597 = vpop.f32.mrb[0].mxu0
    %1598 = vdwg.mxu0
    %v1600 = vsel %vm1010, %v1371, 0
    %v1603 = vsel %vm1010, %v1372, 0
    %1605 = vmatprep.subr.bf16.mxu0 0
    %1606 = vmatpush1.bf16.msra.mxu0 %v209
    %1607 = vmatprep.subr.bf16.mxu0 0
    %1608 = vmatpush1.bf16.msra.mxu0 0
    %1609 = vmatprep.subr.bf16.mxu0 0
    %1610 = vmatpush1.bf16.msra.mxu0 0
    %1611 = vmatprep.subr.bf16.mxu0 0
    %1612 = vmatpush1.bf16.msra.mxu0 0
    %1613 = vmatprep.subr.bf16.mxu0 0
    %1614 = vmatpush1.bf16.msra.mxu0 0
    %1615 = vmatprep.subr.bf16.mxu0 0
    %1616 = vmatpush1.bf16.msra.mxu0 0
    %1617 = vmatprep.subr.bf16.mxu0 0
    %1618 = vmatpush1.bf16.msra.mxu0 0
    %1619 = vmatprep.subr.bf16.mxu0 0
    %1620 = vmatpush1.bf16.msra.mxu0 0
    %1621 = vmatprep.subr.bf16.mxu0 0
    %1622 = vmatpush1.bf16.msra.mxu0 0
    %1623 = vmatprep.subr.bf16.mxu0 0
    %1624 = vmatpush1.bf16.msra.mxu0 0
    %1625 = vmatprep.subr.bf16.mxu0 0
    %1626 = vmatpush1.bf16.msra.mxu0 0
    %1627 = vmatprep.subr.bf16.mxu0 0
    %1628 = vmatpush1.bf16.msra.mxu0 0
    %1629 = vmatprep.subr.bf16.mxu0 0
    %1630 = vmatpush1.bf16.msra.mxu0 0
    %1631 = vmatprep.subr.bf16.mxu0 0
    %1632 = vmatpush1.bf16.msra.mxu0 0
    %1633 = vmatprep.subr.bf16.mxu0 0
    %1634 = vmatpush1.bf16.msra.mxu0 0
    %1635 = vmatprep.subr.bf16.mxu0 0
    %1636 = vmatpush1.bf16.msra.mxu0 0
    %1637 = vmatprep.mubr.bf16.mxu0 0
    %1638 = vmatmul.mubr.bf16.gmra.mrb[0].mxu0 %v1600
    %v1639 = vpop.f32.mrb[0].mxu0
    %v1640 = vadd.f32 0.0, %v1639
    %v1641 = vpop.f32.mrb[0].mxu0
    %v1642 = vpop.f32.mrb[0].mxu0
    %v1643 = vadd.f32 0.0, %v1642
    %v1644 = vpop.f32.mrb[0].mxu0
    %1645 = vmatprep.mubr.bf16.mxu0 0
    %1646 = vmatmul.mubr.bf16.gmra.mrb[0].mxu0 %v1603
    %v1647 = vpop.f32.mrb[0].mxu0
    %v1648 = vadd.f32 0.0, %v1647
    %v1649 = vpop.f32.mrb[0].mxu0
    %v1650 = vpop.f32.mrb[0].mxu0
    %v1651 = vadd.f32 0.0, %v1650
    %v1652 = vpop.f32.mrb[0].mxu0
    %1653 = vdwg.mxu0
    %v1655 = vsel %vm1010, %v1373, 0
    %v1658 = vsel %vm1010, %v1374, 0
    %1660 = vmatprep.subr.bf16.mxu0 0
    %1661 = vmatpush1.bf16.msra.mxu0 %v210
    %1662 = vmatprep.subr.bf16.mxu0 0
    %1663 = vmatpush1.bf16.msra.mxu0 0
    %1664 = vmatprep.subr.bf16.mxu0 0
    %1665 = vmatpush1.bf16.msra.mxu0 0
    %1666 = vmatprep.subr.bf16.mxu0 0
    %1667 = vmatpush1.bf16.msra.mxu0 0
    %1668 = vmatprep.subr.bf16.mxu0 0
    %1669 = vmatpush1.bf16.msra.mxu0 0
    %1670 = vmatprep.subr.bf16.mxu0 0
    %1671 = vmatpush1.bf16.msra.mxu0 0
    %1672 = vmatprep.subr.bf16.mxu0 0
    %1673 = vmatpush1.bf16.msra.mxu0 0
    %1674 = vmatprep.subr.bf16.mxu0 0
    %1675 = vmatpush1.bf16.msra.mxu0 0
    %1676 = vmatprep.subr.bf16.mxu0 0
    %1677 = vmatpush1.bf16.msra.mxu0 0
    %1678 = vmatprep.subr.bf16.mxu0 0
    %1679 = vmatpush1.bf16.msra.mxu0 0
    %1680 = vmatprep.subr.bf16.mxu0 0
    %1681 = vmatpush1.bf16.msra.mxu0 0
    %1682 = vmatprep.subr.bf16.mxu0 0
    %1683 = vmatpush1.bf16.msra.mxu0 0
    %1684 = vmatprep.subr.bf16.mxu0 0
    %1685 = vmatpush1.bf16.msra.mxu0 0
    %1686 = vmatprep.subr.bf16.mxu0 0
    %1687 = vmatpush1.bf16.msra.mxu0 0
    %1688 = vmatprep.subr.bf16.mxu0 0
    %1689 = vmatpush1.bf16.msra.mxu0 0
    %1690 = vmatprep.subr.bf16.mxu0 0
    %1691 = vmatpush1.bf16.msra.mxu0 0
    %1692 = vmatprep.mubr.bf16.mxu0 0
    %1693 = vmatmul.mubr.bf16.gmra.mrb[0].mxu0 %v1655
    %v1694 = vpop.f32.mrb[0].mxu0
    %v1695 = vadd.f32 0.0, %v1694
    %v1696 = vpop.f32.mrb[0].mxu0
    %v1697 = vpop.f32.mrb[0].mxu0
    %v1698 = vadd.f32 0.0, %v1697
    %v1699 = vpop.f32.mrb[0].mxu0
    %1700 = vmatprep.mubr.bf16.mxu0 0
    %1701 = vmatmul.mubr.bf16.gmra.mrb[0].mxu0 %v1658
    %v1702 = vpop.f32.mrb[0].mxu0
    %v1703 = vadd.f32 0.0, %v1702
    %v1704 = vpop.f32.mrb[0].mxu0
    %v1705 = vpop.f32.mrb[0].mxu0
    %v1706 = vadd.f32 0.0, %v1705
    %v1707 = vpop.f32.mrb[0].mxu0
    %1708 = vdwg.mxu0
    %v1710 = vsel %vm1010, %v1375, 0
    %v1713 = vsel %vm1010, %v1376, 0
    %1715 = vmatprep.subr.bf16.mxu0 0
    %1716 = vmatpush1.bf16.msra.mxu0 %v211
    %1717 = vmatprep.subr.bf16.mxu0 0
    %1718 = vmatpush1.bf16.msra.mxu0 0
    %1719 = vmatprep.subr.bf16.mxu0 0
    %1720 = vmatpush1.bf16.msra.mxu0 0
    %1721 = vmatprep.subr.bf16.mxu0 0
    %1722 = vmatpush1.bf16.msra.mxu0 0
    %1723 = vmatprep.subr.bf16.mxu0 0
    %1724 = vmatpush1.bf16.msra.mxu0 0
    %1725 = vmatprep.subr.bf16.mxu0 0
    %1726 = vmatpush1.bf16.msra.mxu0 0
    %1727 = vmatprep.subr.bf16.mxu0 0
    %1728 = vmatpush1.bf16.msra.mxu0 0
    %1729 = vmatprep.subr.bf16.mxu0 0
    %1730 = vmatpush1.bf16.msra.mxu0 0
    %1731 = vmatprep.subr.bf16.mxu0 0
    %1732 = vmatpush1.bf16.msra.mxu0 0
    %1733 = vmatprep.subr.bf16.mxu0 0
    %1734 = vmatpush1.bf16.msra.mxu0 0
    %1735 = vmatprep.subr.bf16.mxu0 0
    %1736 = vmatpush1.bf16.msra.mxu0 0
    %1737 = vmatprep.subr.bf16.mxu0 0
    %1738 = vmatpush1.bf16.msra.mxu0 0
    %1739 = vmatprep.subr.bf16.mxu0 0
    %1740 = vmatpush1.bf16.msra.mxu0 0
    %1741 = vmatprep.subr.bf16.mxu0 0
    %1742 = vmatpush1.bf16.msra.mxu0 0
    %1743 = vmatprep.subr.bf16.mxu0 0
    %1744 = vmatpush1.bf16.msra.mxu0 0
    %1745 = vmatprep.subr.bf16.mxu0 0
    %1746 = vmatpush1.bf16.msra.mxu0 0
    %1747 = vmatprep.mubr.bf16.mxu0 0
    %1748 = vmatmul.mubr.bf16.gmra.mrb[0].mxu0 %v1710
    %v1749 = vpop.f32.mrb[0].mxu0
    %v1750 = vadd.f32 0.0, %v1749
    %v1751 = vpop.f32.mrb[0].mxu0
    %v1752 = vpop.f32.mrb[0].mxu0
    %v1753 = vadd.f32 0.0, %v1752
    %v1754 = vpop.f32.mrb[0].mxu0
    %1755 = vmatprep.mubr.bf16.mxu0 0
    %1756 = vmatmul.mubr.bf16.gmra.mrb[0].mxu0 %v1713
    %v1757 = vpop.f32.mrb[0].mxu0
    %v1758 = vadd.f32 0.0, %v1757
    %v1759 = vpop.f32.mrb[0].mxu0
    %v1760 = vpop.f32.mrb[0].mxu0
    %v1761 = vadd.f32 0.0, %v1760
    %v1762 = vpop.f32.mrb[0].mxu0
    %1763 = vdwg.mxu0
    %v1765 = vsel %vm1010, %v1377, 0
    %v1768 = vsel %vm1010, %v1378, 0
    %1770 = vmatprep.subr.bf16.mxu0 0
    %1771 = vmatpush1.bf16.msra.mxu0 %v212
    %1772 = vmatprep.subr.bf16.mxu0 0
    %1773 = vmatpush1.bf16.msra.mxu0 0
    %1774 = vmatprep.subr.bf16.mxu0 0
    %1775 = vmatpush1.bf16.msra.mxu0 0
    %1776 = vmatprep.subr.bf16.mxu0 0
    %1777 = vmatpush1.bf16.msra.mxu0 0
    %1778 = vmatprep.subr.bf16.mxu0 0
    %1779 = vmatpush1.bf16.msra.mxu0 0
    %1780 = vmatprep.subr.bf16.mxu0 0
    %1781 = vmatpush1.bf16.msra.mxu0 0
    %1782 = vmatprep.subr.bf16.mxu0 0
    %1783 = vmatpush1.bf16.msra.mxu0 0
    %1784 = vmatprep.subr.bf16.mxu0 0
    %1785 = vmatpush1.bf16.msra.mxu0 0
    %1786 = vmatprep.subr.bf16.mxu0 0
    %1787 = vmatpush1.bf16.msra.mxu0 0
    %1788 = vmatprep.subr.bf16.mxu0 0
    %1789 = vmatpush1.bf16.msra.mxu0 0
    %1790 = vmatprep.subr.bf16.mxu0 0
    %1791 = vmatpush1.bf16.msra.mxu0 0
    %1792 = vmatprep.subr.bf16.mxu0 0
    %1793 = vmatpush1.bf16.msra.mxu0 0
    %1794 = vmatprep.subr.bf16.mxu0 0
    %1795 = vmatpush1.bf16.msra.mxu0 0
    %1796 = vmatprep.subr.bf16.mxu0 0
    %1797 = vmatpush1.bf16.msra.mxu0 0
    %1798 = vmatprep.subr.bf16.mxu0 0
    %1799 = vmatpush1.bf16.msra.mxu0 0
    %1800 = vmatprep.subr.bf16.mxu0 0
    %1801 = vmatpush1.bf16.msra.mxu0 0
    %1802 = vmatprep.mubr.bf16.mxu0 0
    %1803 = vmatmul.mubr.bf16.gmra.mrb[0].mxu0 %v1765
    %v1804 = vpop.f32.mrb[0].mxu0
    %v1805 = vadd.f32 0.0, %v1804
    %v1806 = vpop.f32.mrb[0].mxu0
    %v1807 = vpop.f32.mrb[0].mxu0
    %v1808 = vadd.f32 0.0, %v1807
    %v1809 = vpop.f32.mrb[0].mxu0
    %1810 = vmatprep.mubr.bf16.mxu0 0
    %1811 = vmatmul.mubr.bf16.gmra.mrb[0].mxu0 %v1768
    %v1812 = vpop.f32.mrb[0].mxu0
    %v1813 = vadd.f32 0.0, %v1812
    %v1814 = vpop.f32.mrb[0].mxu0
    %v1815 = vpop.f32.mrb[0].mxu0
    %v1816 = vadd.f32 0.0, %v1815
    %v1817 = vpop.f32.mrb[0].mxu0
    %1818 = vdwg.mxu0
    %v1819 = vpack.c.bf16 %v1423, %v1420
    %v1820 = vpack.c.bf16 %v1431, %v1428
    %v1821 = vpack.c.bf16 %v1478, %v1475
    %v1822 = vpack.c.bf16 %v1486, %v1483
    %v1823 = vpack.c.bf16 %v1533, %v1530
    %v1824 = vpack.c.bf16 %v1541, %v1538
    %v1825 = vpack.c.bf16 %v1588, %v1585
    %v1826 = vpack.c.bf16 %v1596, %v1593
    %v1827 = vpack.c.bf16 %v1643, %v1640
    %v1828 = vpack.c.bf16 %v1651, %v1648
    %v1829 = vpack.c.bf16 %v1698, %v1695
    %v1830 = vpack.c.bf16 %v1706, %v1703
    %v1831 = vpack.c.bf16 %v1753, %v1750
    %v1832 = vpack.c.bf16 %v1761, %v1758
    %v1833 = vpack.c.bf16 %v1808, %v1805
    %v1834 = vpack.c.bf16 %v1816, %v1813
    %v1835 = vld [vmem:[#allocation8] sm:$0xf]
    %v1836 = vld [vmem:[#allocation8 + $0x4] sm:$0xf]
    %v1837 = vld [vmem:[#allocation8 + $0x8] sm:$0xf]
    %v1838 = vld [vmem:[#allocation8 + $0xc] sm:$0xf]
    %v1839 = vld [vmem:[#allocation8 + $0x10] sm:$0xf]
    %v1840 = vld [vmem:[#allocation8 + $0x14] sm:$0xf]
    %v1841 = vld [vmem:[#allocation8 + $0x18] sm:$0xf]
    %v1842 = vld [vmem:[#allocation8 + $0x1c] sm:$0xf]
    %v1843 = vld [vmem:[#allocation8 + $0x20] sm:$0xf]
    %v1844 = vld [vmem:[#allocation8 + $0x24] sm:$0xf]
    %v1845 = vld [vmem:[#allocation8 + $0x28] sm:$0xf]
    %v1846 = vld [vmem:[#allocation8 + $0x2c] sm:$0xf]
    %v1847 = vld [vmem:[#allocation8 + $0x30] sm:$0xf]
    %v1848 = vld [vmem:[#allocation8 + $0x34] sm:$0xf]
    %v1849 = vld [vmem:[#allocation8 + $0x38] sm:$0xf]
    %v1850 = vld [vmem:[#allocation8 + $0x3c] sm:$0xf]
    %v1851 = vld [vmem:[#allocation8 + $0x40] sm:$0xf]
    %v1852 = vld [vmem:[#allocation8 + $0x44] sm:$0xf]
    %v1853 = vld [vmem:[#allocation8 + $0x48] sm:$0xf]
    %v1854 = vld [vmem:[#allocation8 + $0x4c] sm:$0xf]
    %v1855 = vld [vmem:[#allocation8 + $0x50] sm:$0xf]
    %v1856 = vld [vmem:[#allocation8 + $0x54] sm:$0xf]
    %v1857 = vld [vmem:[#allocation8 + $0x58] sm:$0xf]
    %v1858 = vld [vmem:[#allocation8 + $0x5c] sm:$0xf]
    %v1859 = vld [vmem:[#allocation8 + $0x60] sm:$0xf]
    %v1860 = vld [vmem:[#allocation8 + $0x64] sm:$0xf]
    %v1861 = vld [vmem:[#allocation8 + $0x68] sm:$0xf]
    %v1862 = vld [vmem:[#allocation8 + $0x6c] sm:$0xf]
    %v1863 = vld [vmem:[#allocation8 + $0x70] sm:$0xf]
    %v1864 = vld [vmem:[#allocation8 + $0x74] sm:$0xf]
    %v1865 = vld [vmem:[#allocation8 + $0x78] sm:$0xf]
    %v1866 = vld [vmem:[#allocation8 + $0x7c] sm:$0xf]
    %v1867 = vld [vmem:[%s6] sm:$0x1]
    %v1869 = vlaneseq
    %v1870 = vshrl.u32 %v1869, 7
    %v1871 = vsub.s32 0, %v1870
    %v1872 = vrot.slane %v1867, %v1871
    %v1906 = vunpack.c.l.b16 %v1835
    %v1907 = vunpack.c.l.b16 %v1836
    %v1908 = vunpack.c.l.b16 %v1837
    %v1909 = vunpack.c.l.b16 %v1838
    %v1910 = vunpack.c.l.b16 %v1839
    %v1911 = vunpack.c.l.b16 %v1840
    %v1912 = vunpack.c.l.b16 %v1841
    %v1913 = vunpack.c.l.b16 %v1842
    %v1914 = vunpack.c.l.b16 %v1843
    %v1915 = vunpack.c.l.b16 %v1844
    %v1916 = vunpack.c.l.b16 %v1845
    %v1917 = vunpack.c.l.b16 %v1846
    %v1918 = vunpack.c.l.b16 %v1847
    %v1919 = vunpack.c.l.b16 %v1848
    %v1920 = vunpack.c.l.b16 %v1849
    %v1921 = vunpack.c.l.b16 %v1850
    %v1922 = vunpack.c.l.b16 %v1851
    %v1923 = vunpack.c.l.b16 %v1852
    %v1924 = vunpack.c.l.b16 %v1853
    %v1925 = vunpack.c.l.b16 %v1854
    %v1926 = vunpack.c.l.b16 %v1855
    %v1927 = vunpack.c.l.b16 %v1856
    %v1928 = vunpack.c.l.b16 %v1857
    %v1929 = vunpack.c.l.b16 %v1858
    %v1930 = vunpack.c.l.b16 %v1859
    %v1931 = vunpack.c.l.b16 %v1860
    %v1932 = vunpack.c.l.b16 %v1861
    %v1933 = vunpack.c.l.b16 %v1862
    %v1934 = vunpack.c.l.b16 %v1863
    %v1935 = vunpack.c.l.b16 %v1864
    %v1936 = vunpack.c.l.b16 %v1865
    %v1937 = vunpack.c.l.b16 %v1866
    %v1938 = vpack.c.b16 %v1907, %v1906
    %v1939 = vpack.c.b16 %v1909, %v1908
    %v1940 = vpack.c.b16 %v1911, %v1910
    %v1941 = vpack.c.b16 %v1913, %v1912
    %v1942 = vpack.c.b16 %v1915, %v1914
    %v1943 = vpack.c.b16 %v1917, %v1916
    %v1944 = vpack.c.b16 %v1919, %v1918
    %v1945 = vpack.c.b16 %v1921, %v1920
    %v1946 = vpack.c.b16 %v1923, %v1922
    %v1947 = vpack.c.b16 %v1925, %v1924
    %v1948 = vpack.c.b16 %v1927, %v1926
    %v1949 = vpack.c.b16 %v1929, %v1928
    %v1950 = vpack.c.b16 %v1931, %v1930
    %v1951 = vpack.c.b16 %v1933, %v1932
    %v1952 = vpack.c.b16 %v1935, %v1934
    %v1953 = vpack.c.b16 %v1937, %v1936
    %1970 = vmatprep.subr.bf16.mxu0 0
    %1971 = vmatpush1.bf16.msra.mxu0 %v1938
    %1972 = vmatprep.subr.bf16.mxu0 0
    %1973 = vmatpush1.bf16.msra.mxu0 %v1939
    %1974 = vmatprep.subr.bf16.mxu0 0
    %1975 = vmatpush1.bf16.msra.mxu0 %v1940
    %1976 = vmatprep.subr.bf16.mxu0 0
    %1977 = vmatpush1.bf16.msra.mxu0 %v1941
    %1978 = vmatprep.subr.bf16.mxu0 0
    %1979 = vmatpush1.bf16.msra.mxu0 %v1942
    %1980 = vmatprep.subr.bf16.mxu0 0
    %1981 = vmatpush1.bf16.msra.mxu0 %v1943
    %1982 = vmatprep.subr.bf16.mxu0 0
    %1983 = vmatpush1.bf16.msra.mxu0 %v1944
    %1984 = vmatprep.subr.bf16.mxu0 0
    %1985 = vmatpush1.bf16.msra.mxu0 %v1945
    %1986 = vmatprep.subr.bf16.mxu0 0
    %1987 = vmatpush1.bf16.msra.mxu0 %v1946
    %1988 = vmatprep.subr.bf16.mxu0 0
    %1989 = vmatpush1.bf16.msra.mxu0 %v1947
    %1990 = vmatprep.subr.bf16.mxu0 0
    %1991 = vmatpush1.bf16.msra.mxu0 %v1948
    %1992 = vmatprep.subr.bf16.mxu0 0
    %1993 = vmatpush1.bf16.msra.mxu0 %v1949
    %1994 = vmatprep.subr.bf16.mxu0 0
    %1995 = vmatpush1.bf16.msra.mxu0 %v1950
    %1996 = vmatprep.subr.bf16.mxu0 0
    %1997 = vmatpush1.bf16.msra.mxu0 %v1951
    %1998 = vmatprep.subr.bf16.mxu0 0
    %1999 = vmatpush1.bf16.msra.mxu0 %v1952
    %2000 = vmatprep.subr.bf16.mxu0 0
    %2001 = vmatpush1.bf16.msra.mxu0 %v1953
    %2002 = vmatprep.mubr.bf16.mxu0 %v382
    %2003 = vmatmul.mubr.bf16.gmra.mrb[0].mxu0 %v1819
    %v2004 = vpop.f32.mrb[0].mxu0
    %v2005 = vadd.f32 %v1872, %v2004
    %v2006 = vpop.f32.mrb[0].mxu0
    %v2007 = vpop.f32.mrb[0].mxu0
    %v2008 = vadd.f32 %v1872, %v2007
    %v2009 = vpop.f32.mrb[0].mxu0
    %2010 = vmatprep.mubr.bf16.mxu0 %v383
    %2011 = vmatmul.mubr.bf16.gmra.mrb[0].mxu0 %v1820
    %v2012 = vpop.f32.mrb[0].mxu0
    %v2013 = vadd.f32 %v1872, %v2012
    %v2014 = vpop.f32.mrb[0].mxu0
    %v2015 = vpop.f32.mrb[0].mxu0
    %v2016 = vadd.f32 %v1872, %v2015
    %v2017 = vpop.f32.mrb[0].mxu0
    %2018 = vmatprep.mubr.bf16.mxu0 %v443
    %2019 = vmatmul.mubr.bf16.gmra.mrb[0].mxu0 %v1821
    %v2020 = vpop.f32.mrb[0].mxu0
    %v2021 = vadd.f32 %v1872, %v2020
    %v2022 = vpop.f32.mrb[0].mxu0
    %v2023 = vpop.f32.mrb[0].mxu0
    %v2024 = vadd.f32 %v1872, %v2023
    %v2025 = vpop.f32.mrb[0].mxu0
    %2026 = vmatprep.mubr.bf16.mxu0 %v444
    %2027 = vmatmul.mubr.bf16.gmra.mrb[0].mxu0 %v1822
    %v2028 = vpop.f32.mrb[0].mxu0
    %v2029 = vadd.f32 %v1872, %v2028
    %v2030 = vpop.f32.mrb[0].mxu0
    %v2031 = vpop.f32.mrb[0].mxu0
    %v2032 = vadd.f32 %v1872, %v2031
    %v2033 = vpop.f32.mrb[0].mxu0
    %2034 = vmatprep.mubr.bf16.mxu0 %v504
    %2035 = vmatmul.mubr.bf16.gmra.mrb[0].mxu0 %v1823
    %v2036 = vpop.f32.mrb[0].mxu0
    %v2037 = vadd.f32 %v1872, %v2036
    %v2038 = vpop.f32.mrb[0].mxu0
    %v2039 = vpop.f32.mrb[0].mxu0
    %v2040 = vadd.f32 %v1872, %v2039
    %v2041 = vpop.f32.mrb[0].mxu0
    %2042 = vmatprep.mubr.bf16.mxu0 %v505
    %2043 = vmatmul.mubr.bf16.gmra.mrb[0].mxu0 %v1824
    %v2044 = vpop.f32.mrb[0].mxu0
    %v2045 = vadd.f32 %v1872, %v2044
    %v2046 = vpop.f32.mrb[0].mxu0
    %v2047 = vpop.f32.mrb[0].mxu0
    %v2048 = vadd.f32 %v1872, %v2047
    %v2049 = vpop.f32.mrb[0].mxu0
    %2050 = vmatprep.mubr.bf16.mxu0 %v565
    %2051 = vmatmul.mubr.bf16.gmra.mrb[0].mxu0 %v1825
    %v2052 = vpop.f32.mrb[0].mxu0
    %v2053 = vadd.f32 %v1872, %v2052
    %v2054 = vpop.f32.mrb[0].mxu0
    %v2055 = vpop.f32.mrb[0].mxu0
    %v2056 = vadd.f32 %v1872, %v2055
    %v2057 = vpop.f32.mrb[0].mxu0
    %2058 = vmatprep.mubr.bf16.mxu0 %v566
    %2059 = vmatmul.mubr.bf16.gmra.mrb[0].mxu0 %v1826
    %v2060 = vpop.f32.mrb[0].mxu0
    %v2061 = vadd.f32 %v1872, %v2060
    %v2062 = vpop.f32.mrb[0].mxu0
    %v2063 = vpop.f32.mrb[0].mxu0
    %v2064 = vadd.f32 %v1872, %v2063
    %v2065 = vpop.f32.mrb[0].mxu0
    %2066 = vmatprep.mubr.bf16.mxu0 %v626
    %2067 = vmatmul.mubr.bf16.gmra.mrb[0].mxu0 %v1827
    %v2068 = vpop.f32.mrb[0].mxu0
    %v2069 = vadd.f32 %v1872, %v2068
    %v2070 = vpop.f32.mrb[0].mxu0
    %v2071 = vpop.f32.mrb[0].mxu0
    %v2072 = vadd.f32 %v1872, %v2071
    %v2073 = vpop.f32.mrb[0].mxu0
    %2074 = vmatprep.mubr.bf16.mxu0 %v627
    %2075 = vmatmul.mubr.bf16.gmra.mrb[0].mxu0 %v1828
    %v2076 = vpop.f32.mrb[0].mxu0
    %v2077 = vadd.f32 %v1872, %v2076
    %v2078 = vpop.f32.mrb[0].mxu0
    %v2079 = vpop.f32.mrb[0].mxu0
    %v2080 = vadd.f32 %v1872, %v2079
    %v2081 = vpop.f32.mrb[0].mxu0
    %2082 = vmatprep.mubr.bf16.mxu0 %v687
    %2083 = vmatmul.mubr.bf16.gmra.mrb[0].mxu0 %v1829
    %v2084 = vpop.f32.mrb[0].mxu0
    %v2085 = vadd.f32 %v1872, %v2084
    %v2086 = vpop.f32.mrb[0].mxu0
    %v2087 = vpop.f32.mrb[0].mxu0
    %v2088 = vadd.f32 %v1872, %v2087
    %v2089 = vpop.f32.mrb[0].mxu0
    %2090 = vmatprep.mubr.bf16.mxu0 %v688
    %2091 = vmatmul.mubr.bf16.gmra.mrb[0].mxu0 %v1830
    %v2092 = vpop.f32.mrb[0].mxu0
    %v2093 = vadd.f32 %v1872, %v2092
    %v2094 = vpop.f32.mrb[0].mxu0
    %v2095 = vpop.f32.mrb[0].mxu0
    %v2096 = vadd.f32 %v1872, %v2095
    %v2097 = vpop.f32.mrb[0].mxu0
    %2098 = vmatprep.mubr.bf16.mxu0 %v748
    %2099 = vmatmul.mubr.bf16.gmra.mrb[0].mxu0 %v1831
    %v2100 = vpop.f32.mrb[0].mxu0
    %v2101 = vadd.f32 %v1872, %v2100
    %v2102 = vpop.f32.mrb[0].mxu0
    %v2103 = vpop.f32.mrb[0].mxu0
    %v2104 = vadd.f32 %v1872, %v2103
    %v2105 = vpop.f32.mrb[0].mxu0
    %2106 = vmatprep.mubr.bf16.mxu0 %v749
    %2107 = vmatmul.mubr.bf16.gmra.mrb[0].mxu0 %v1832
    %v2108 = vpop.f32.mrb[0].mxu0
    %v2109 = vadd.f32 %v1872, %v2108
    %v2110 = vpop.f32.mrb[0].mxu0
    %v2111 = vpop.f32.mrb[0].mxu0
    %v2112 = vadd.f32 %v1872, %v2111
    %v2113 = vpop.f32.mrb[0].mxu0
    %2114 = vmatprep.mubr.bf16.mxu0 %v809
    %2115 = vmatmul.mubr.bf16.gmra.mrb[0].mxu0 %v1833
    %v2116 = vpop.f32.mrb[0].mxu0
    %v2117 = vadd.f32 %v1872, %v2116
    %v2118 = vpop.f32.mrb[0].mxu0
    %v2119 = vpop.f32.mrb[0].mxu0
    %v2120 = vadd.f32 %v1872, %v2119
    %v2121 = vpop.f32.mrb[0].mxu0
    %2122 = vmatprep.mubr.bf16.mxu0 %v810
    %2123 = vmatmul.mubr.bf16.gmra.mrb[0].mxu0 %v1834
    %v2124 = vpop.f32.mrb[0].mxu0
    %v2125 = vadd.f32 %v1872, %v2124
    %v2126 = vpop.f32.mrb[0].mxu0
    %v2127 = vpop.f32.mrb[0].mxu0
    %v2128 = vadd.f32 %v1872, %v2127
    %v2129 = vpop.f32.mrb[0].mxu0
    %2130 = vdwg.mxu0
    %v2131 = vtanh.pop %v2005
    %v2132 = vtanh.pop %v2008
    %v2133 = vtanh.pop %v2013
    %v2134 = vtanh.pop %v2016
    %v2135 = vtanh.pop %v2021
    %v2136 = vtanh.pop %v2024
    %v2137 = vtanh.pop %v2029
    %v2138 = vtanh.pop %v2032
    %v2139 = vtanh.pop %v2037
    %v2140 = vtanh.pop %v2040
    %v2141 = vtanh.pop %v2045
    %v2142 = vtanh.pop %v2048
    %v2143 = vtanh.pop %v2053
    %v2144 = vtanh.pop %v2056
    %v2145 = vtanh.pop %v2061
    %v2146 = vtanh.pop %v2064
    %v2147 = vtanh.pop %v2069
    %v2148 = vtanh.pop %v2072
    %v2149 = vtanh.pop %v2077
    %v2150 = vtanh.pop %v2080
    %v2151 = vtanh.pop %v2085
    %v2152 = vtanh.pop %v2088
    %v2153 = vtanh.pop %v2093
    %v2154 = vtanh.pop %v2096
    %v2155 = vtanh.pop %v2101
    %v2156 = vtanh.pop %v2104
    %v2157 = vtanh.pop %v2109
    %v2158 = vtanh.pop %v2112
    %v2159 = vtanh.pop %v2117
    %v2160 = vtanh.pop %v2120
    %v2161 = vtanh.pop %v2125
    %v2162 = vtanh.pop %v2128
    %v2163 = vpack.c.bf16 %v2132, %v2131
    %v2164 = vpack.c.bf16 %v2134, %v2133
    %v2165 = vpack.c.bf16 %v2136, %v2135
    %v2166 = vpack.c.bf16 %v2138, %v2137
    %v2167 = vpack.c.bf16 %v2140, %v2139
    %v2168 = vpack.c.bf16 %v2142, %v2141
    %v2169 = vpack.c.bf16 %v2144, %v2143
    %v2170 = vpack.c.bf16 %v2146, %v2145
    %v2171 = vpack.c.bf16 %v2148, %v2147
    %v2172 = vpack.c.bf16 %v2150, %v2149
    %v2173 = vpack.c.bf16 %v2152, %v2151
    %v2174 = vpack.c.bf16 %v2154, %v2153
    %v2175 = vpack.c.bf16 %v2156, %v2155
    %v2176 = vpack.c.bf16 %v2158, %v2157
    %v2177 = vpack.c.bf16 %v2160, %v2159
    %v2178 = vpack.c.bf16 %v2162, %v2161
    %v2179 = vld [vmem:[#allocation10] sm:$0xf]
    %v2180 = vld [vmem:[#allocation10 + $0x4] sm:$0xf]
    %v2181 = vld [vmem:[#allocation10 + $0x8] sm:$0xf]
    %v2182 = vld [vmem:[#allocation10 + $0xc] sm:$0xf]
    %v2183 = vld [vmem:[#allocation10 + $0x10] sm:$0xf]
    %v2184 = vld [vmem:[#allocation10 + $0x14] sm:$0xf]
    %v2185 = vld [vmem:[#allocation10 + $0x18] sm:$0xf]
    %v2186 = vld [vmem:[#allocation10 + $0x1c] sm:$0xf]
    %v2187 = vld [vmem:[#allocation10 + $0x20] sm:$0xf]
    %v2188 = vld [vmem:[#allocation10 + $0x24] sm:$0xf]
    %v2189 = vld [vmem:[#allocation10 + $0x28] sm:$0xf]
    %v2190 = vld [vmem:[#allocation10 + $0x2c] sm:$0xf]
    %v2191 = vld [vmem:[#allocation10 + $0x30] sm:$0xf]
    %v2192 = vld [vmem:[#allocation10 + $0x34] sm:$0xf]
    %v2193 = vld [vmem:[#allocation10 + $0x38] sm:$0xf]
    %v2194 = vld [vmem:[#allocation10 + $0x3c] sm:$0xf]
    %v2195 = vld [vmem:[%s8] sm:$0x1]
    %v2197 = vlaneseq
    %v2198 = vshrl.u32 %v2197, 7
    %v2199 = vsub.s32 0, %v2198
    %v2200 = vrot.slane %v2195, %v2199
    %v2218 = vunpack.c.l.b16 %v2179
    %v2219 = vunpack.c.l.b16 %v2180
    %v2220 = vunpack.c.l.b16 %v2181
    %v2221 = vunpack.c.l.b16 %v2182
    %v2222 = vunpack.c.l.b16 %v2183
    %v2223 = vunpack.c.l.b16 %v2184
    %v2224 = vunpack.c.l.b16 %v2185
    %v2225 = vunpack.c.l.b16 %v2186
    %v2226 = vunpack.c.l.b16 %v2187
    %v2227 = vunpack.c.l.b16 %v2188
    %v2228 = vunpack.c.l.b16 %v2189
    %v2229 = vunpack.c.l.b16 %v2190
    %v2230 = vunpack.c.l.b16 %v2191
    %v2231 = vunpack.c.l.b16 %v2192
    %v2232 = vunpack.c.l.b16 %v2193
    %v2233 = vunpack.c.l.b16 %v2194
    %v2234 = vpack.c.b16 %v2219, %v2218
    %v2235 = vpack.c.b16 %v2221, %v2220
    %v2236 = vpack.c.b16 %v2223, %v2222
    %v2237 = vpack.c.b16 %v2225, %v2224
    %v2238 = vpack.c.b16 %v2227, %v2226
    %v2239 = vpack.c.b16 %v2229, %v2228
    %v2240 = vpack.c.b16 %v2231, %v2230
    %v2241 = vpack.c.b16 %v2233, %v2232
    %2250 = vmatprep.subr.bf16.mxu0 0
    %2251 = vmatpush1.bf16.msra.mxu0 %v2234
    %2252 = vmatprep.subr.bf16.mxu0 0
    %2253 = vmatpush1.bf16.msra.mxu0 %v2235
    %2254 = vmatprep.subr.bf16.mxu0 0
    %2255 = vmatpush1.bf16.msra.mxu0 %v2236
    %2256 = vmatprep.subr.bf16.mxu0 0
    %2257 = vmatpush1.bf16.msra.mxu0 %v2237
    %2258 = vmatprep.subr.bf16.mxu0 0
    %2259 = vmatpush1.bf16.msra.mxu0 %v2238
    %2260 = vmatprep.subr.bf16.mxu0 0
    %2261 = vmatpush1.bf16.msra.mxu0 %v2239
    %2262 = vmatprep.subr.bf16.mxu0 0
    %2263 = vmatpush1.bf16.msra.mxu0 %v2240
    %2264 = vmatprep.subr.bf16.mxu0 0
    %2265 = vmatpush1.bf16.msra.mxu0 %v2241
    %2266 = vmatprep.subr.bf16.mxu0 0
    %2267 = vmatpush1.bf16.msra.mxu0 0
    %2268 = vmatprep.subr.bf16.mxu0 0
    %2269 = vmatpush1.bf16.msra.mxu0 0
    %2270 = vmatprep.subr.bf16.mxu0 0
    %2271 = vmatpush1.bf16.msra.mxu0 0
    %2272 = vmatprep.subr.bf16.mxu0 0
    %2273 = vmatpush1.bf16.msra.mxu0 0
    %2274 = vmatprep.subr.bf16.mxu0 0
    %2275 = vmatpush1.bf16.msra.mxu0 0
    %2276 = vmatprep.subr.bf16.mxu0 0
    %2277 = vmatpush1.bf16.msra.mxu0 0
    %2278 = vmatprep.subr.bf16.mxu0 0
    %2279 = vmatpush1.bf16.msra.mxu0 0
    %2280 = vmatprep.subr.bf16.mxu0 0
    %2281 = vmatpush1.bf16.msra.mxu0 0
    %2282 = vmatprep.mubr.bf16.mxu0 0
    %2283 = vmatmul.mubr.bf16.gmra.mrb[0].mxu0 %v2163
    %v2284 = vpop.f32.mrb[0].mxu0
    %v2285 = vadd.f32 %v2200, %v2284
    %v2286 = vpop.f32.mrb[0].mxu0
    %v2287 = vpop.f32.mrb[0].mxu0
    %v2288 = vadd.f32 %v2200, %v2287
    %v2289 = vpop.f32.mrb[0].mxu0
    %2290 = vmatprep.mubr.bf16.mxu0 0
    %2291 = vmatmul.mubr.bf16.gmra.mrb[0].mxu0 %v2164
    %v2292 = vpop.f32.mrb[0].mxu0
    %v2293 = vadd.f32 %v2200, %v2292
    %v2294 = vpop.f32.mrb[0].mxu0
    %v2295 = vpop.f32.mrb[0].mxu0
    %v2296 = vadd.f32 %v2200, %v2295
    %v2297 = vpop.f32.mrb[0].mxu0
    %2298 = vmatprep.mubr.bf16.mxu0 0
    %2299 = vmatmul.mubr.bf16.gmra.mrb[0].mxu0 %v2165
    %v2300 = vpop.f32.mrb[0].mxu0
    %v2301 = vadd.f32 %v2200, %v2300
    %v2302 = vpop.f32.mrb[0].mxu0
    %v2303 = vpop.f32.mrb[0].mxu0
    %v2304 = vadd.f32 %v2200, %v2303
    %v2305 = vpop.f32.mrb[0].mxu0
    %2306 = vmatprep.mubr.bf16.mxu0 0
    %2307 = vmatmul.mubr.bf16.gmra.mrb[0].mxu0 %v2166
    %v2308 = vpop.f32.mrb[0].mxu0
    %v2309 = vadd.f32 %v2200, %v2308
    %v2310 = vpop.f32.mrb[0].mxu0
    %v2311 = vpop.f32.mrb[0].mxu0
    %v2312 = vadd.f32 %v2200, %v2311
    %v2313 = vpop.f32.mrb[0].mxu0
    %2314 = vmatprep.mubr.bf16.mxu0 0
    %2315 = vmatmul.mubr.bf16.gmra.mrb[0].mxu0 %v2167
    %v2316 = vpop.f32.mrb[0].mxu0
    %v2317 = vadd.f32 %v2200, %v2316
    %v2318 = vpop.f32.mrb[0].mxu0
    %v2319 = vpop.f32.mrb[0].mxu0
    %v2320 = vadd.f32 %v2200, %v2319
    %v2321 = vpop.f32.mrb[0].mxu0
    %2322 = vmatprep.mubr.bf16.mxu0 0
    %2323 = vmatmul.mubr.bf16.gmra.mrb[0].mxu0 %v2168
    %v2324 = vpop.f32.mrb[0].mxu0
    %v2325 = vadd.f32 %v2200, %v2324
    %v2326 = vpop.f32.mrb[0].mxu0
    %v2327 = vpop.f32.mrb[0].mxu0
    %v2328 = vadd.f32 %v2200, %v2327
    %v2329 = vpop.f32.mrb[0].mxu0
    %2330 = vmatprep.mubr.bf16.mxu0 0
    %2331 = vmatmul.mubr.bf16.gmra.mrb[0].mxu0 %v2169
    %v2332 = vpop.f32.mrb[0].mxu0
    %v2333 = vadd.f32 %v2200, %v2332
    %v2334 = vpop.f32.mrb[0].mxu0
    %v2335 = vpop.f32.mrb[0].mxu0
    %v2336 = vadd.f32 %v2200, %v2335
    %v2337 = vpop.f32.mrb[0].mxu0
    %2338 = vmatprep.mubr.bf16.mxu0 0
    %2339 = vmatmul.mubr.bf16.gmra.mrb[0].mxu0 %v2170
    %v2340 = vpop.f32.mrb[0].mxu0
    %v2341 = vadd.f32 %v2200, %v2340
    %v2342 = vpop.f32.mrb[0].mxu0
    %v2343 = vpop.f32.mrb[0].mxu0
    %v2344 = vadd.f32 %v2200, %v2343
    %v2345 = vpop.f32.mrb[0].mxu0
    %2346 = vmatprep.mubr.bf16.mxu0 0
    %2347 = vmatmul.mubr.bf16.gmra.mrb[0].mxu0 %v2171
    %v2348 = vpop.f32.mrb[0].mxu0
    %v2349 = vadd.f32 %v2200, %v2348
    %v2350 = vpop.f32.mrb[0].mxu0
    %v2351 = vpop.f32.mrb[0].mxu0
    %v2352 = vadd.f32 %v2200, %v2351
    %v2353 = vpop.f32.mrb[0].mxu0
    %2354 = vmatprep.mubr.bf16.mxu0 0
    %2355 = vmatmul.mubr.bf16.gmra.mrb[0].mxu0 %v2172
    %v2356 = vpop.f32.mrb[0].mxu0
    %v2357 = vadd.f32 %v2200, %v2356
    %v2358 = vpop.f32.mrb[0].mxu0
    %v2359 = vpop.f32.mrb[0].mxu0
    %v2360 = vadd.f32 %v2200, %v2359
    %v2361 = vpop.f32.mrb[0].mxu0
    %2362 = vmatprep.mubr.bf16.mxu0 0
    %2363 = vmatmul.mubr.bf16.gmra.mrb[0].mxu0 %v2173
    %v2364 = vpop.f32.mrb[0].mxu0
    %v2365 = vadd.f32 %v2200, %v2364
    %v2366 = vpop.f32.mrb[0].mxu0
    %v2367 = vpop.f32.mrb[0].mxu0
    %v2368 = vadd.f32 %v2200, %v2367
    %v2369 = vpop.f32.mrb[0].mxu0
    %2370 = vmatprep.mubr.bf16.mxu0 0
    %2371 = vmatmul.mubr.bf16.gmra.mrb[0].mxu0 %v2174
    %v2372 = vpop.f32.mrb[0].mxu0
    %v2373 = vadd.f32 %v2200, %v2372
    %v2374 = vpop.f32.mrb[0].mxu0
    %v2375 = vpop.f32.mrb[0].mxu0
    %v2376 = vadd.f32 %v2200, %v2375
    %v2377 = vpop.f32.mrb[0].mxu0
    %2378 = vmatprep.mubr.bf16.mxu0 0
    %2379 = vmatmul.mubr.bf16.gmra.mrb[0].mxu0 %v2175
    %v2380 = vpop.f32.mrb[0].mxu0
    %v2381 = vadd.f32 %v2200, %v2380
    %v2382 = vpop.f32.mrb[0].mxu0
    %v2383 = vpop.f32.mrb[0].mxu0
    %v2384 = vadd.f32 %v2200, %v2383
    %v2385 = vpop.f32.mrb[0].mxu0
    %2386 = vmatprep.mubr.bf16.mxu0 0
    %2387 = vmatmul.mubr.bf16.gmra.mrb[0].mxu0 %v2176
    %v2388 = vpop.f32.mrb[0].mxu0
    %v2389 = vadd.f32 %v2200, %v2388
    %v2390 = vpop.f32.mrb[0].mxu0
    %v2391 = vpop.f32.mrb[0].mxu0
    %v2392 = vadd.f32 %v2200, %v2391
    %v2393 = vpop.f32.mrb[0].mxu0
    %2394 = vmatprep.mubr.bf16.mxu0 0
    %2395 = vmatmul.mubr.bf16.gmra.mrb[0].mxu0 %v2177
    %v2396 = vpop.f32.mrb[0].mxu0
    %v2397 = vadd.f32 %v2200, %v2396
    %v2398 = vpop.f32.mrb[0].mxu0
    %v2399 = vpop.f32.mrb[0].mxu0
    %v2400 = vadd.f32 %v2200, %v2399
    %v2401 = vpop.f32.mrb[0].mxu0
    %2402 = vmatprep.mubr.bf16.mxu0 0
    %2403 = vmatmul.mubr.bf16.gmra.mrb[0].mxu0 %v2178
    %v2404 = vpop.f32.mrb[0].mxu0
    %v2405 = vadd.f32 %v2200, %v2404
    %v2406 = vpop.f32.mrb[0].mxu0
    %v2407 = vpop.f32.mrb[0].mxu0
    %v2408 = vadd.f32 %v2200, %v2407
    %v2409 = vpop.f32.mrb[0].mxu0
    %2410 = vdwg.mxu0
    %2411 = vst [vmem:[#allocation11] sm:$0xff] %v2285
    %2412 = vst [vmem:[#allocation11 + $0x8] sm:$0xff] %v2288
    %2413 = vst [vmem:[#allocation11 + $0x10] sm:$0xff] %v2293
    %2414 = vst [vmem:[#allocation11 + $0x18] sm:$0xff] %v2296
    %2415 = vst [vmem:[#allocation11 + $0x20] sm:$0xff] %v2301
    %2416 = vst [vmem:[#allocation11 + $0x28] sm:$0xff] %v2304
    %2417 = vst [vmem:[#allocation11 + $0x30] sm:$0xff] %v2309
    %2418 = vst [vmem:[#allocation11 + $0x38] sm:$0xff] %v2312
    %2419 = vst [vmem:[#allocation11 + $0x40] sm:$0xff] %v2317
    %2420 = vst [vmem:[#allocation11 + $0x48] sm:$0xff] %v2320
    %2421 = vst [vmem:[#allocation11 + $0x50] sm:$0xff] %v2325
    %2422 = vst [vmem:[#allocation11 + $0x58] sm:$0xff] %v2328
    %2423 = vst [vmem:[#allocation11 + $0x60] sm:$0xff] %v2333
    %2424 = vst [vmem:[#allocation11 + $0x68] sm:$0xff] %v2336
    %2425 = vst [vmem:[#allocation11 + $0x70] sm:$0xff] %v2341
    %2426 = vst [vmem:[#allocation11 + $0x78] sm:$0xff] %v2344
    %2427 = vst [vmem:[#allocation11 + $0x80] sm:$0xff] %v2349
    %2428 = vst [vmem:[#allocation11 + $0x88] sm:$0xff] %v2352
    %2429 = vst [vmem:[#allocation11 + $0x90] sm:$0xff] %v2357
    %2430 = vst [vmem:[#allocation11 + $0x98] sm:$0xff] %v2360
    %2431 = vst [vmem:[#allocation11 + $0xa0] sm:$0xff] %v2365
    %2432 = vst [vmem:[#allocation11 + $0xa8] sm:$0xff] %v2368
    %2433 = vst [vmem:[#allocation11 + $0xb0] sm:$0xff] %v2373
    %2434 = vst [vmem:[#allocation11 + $0xb8] sm:$0xff] %v2376
    %2435 = vst [vmem:[#allocation11 + $0xc0] sm:$0xff] %v2381
    %2436 = vst [vmem:[#allocation11 + $0xc8] sm:$0xff] %v2384
    %2437 = vst [vmem:[#allocation11 + $0xd0] sm:$0xff] %v2389
    %2438 = vst [vmem:[#allocation11 + $0xd8] sm:$0xff] %v2392
    %2439 = vst [vmem:[#allocation11 + $0xe0] sm:$0xff] %v2397
    %2440 = vst [vmem:[#allocation11 + $0xe8] sm:$0xff] %v2400
    %2441 = vst [vmem:[#allocation11 + $0xf0] sm:$0xff] %v2405
    %2442 = vst [vmem:[#allocation11 + $0xf8] sm:$0xff] %v2408
    // Predicated region
    $region58: #{tpu_custom_call.1} parent=1 // pred_check
      _
    $region59: #{tpu_custom_call.1} parent=1 // pred_check_branch
      %2444 = sbr.rel (0) target = $region61
    $region60: #{tpu_custom_call.1} parent=1 // pred_region
      %s2446 = ssub.s32 4096, 4096
      %2447 = vsyncadd [#allocation4], %s2446
      %s2448 = sshll.u32 [#allocation11], 4
      %s2449 = int_to_ptr.vmem [resolvable:$true] %s2448
      %2454 = dma.vmem_to_hbm [thread:$0]  %s2449, 4096, %s9, [#allocation4], 128, 128, 8
    $region61: #{tpu_custom_call.1} parent=1 // pred_fallthru
      _
    // Predicated region
    $region62: #{tpu_custom_call.1} parent=1 // pred_check
      _
    $region63: #{tpu_custom_call.1} parent=1 // pred_check_branch
      %2456 = sbr.rel (0) target = $region65
    $region64: #{tpu_custom_call.1} parent=1 // pred_region
      %2457 = dma.done [#allocation4], 4096
    $region65: #{tpu_custom_call.1} parent=1 // pred_fallthru
      _
    %2458 = vsyncpa [#allocation3], 1
    %2459 = vsyncpa [#allocation6], 1
    %2460 = vsyncpa [#allocation9], 1
    %2461 = vsyncpa [#allocation4], 1

</llo_original>
